<compile_context>
chip_gen: v5e
topology: v5e:2x2
jax: 0.10.0
libtpu: 0.0.40
codegen_flags: <defaults>
</compile_context>

<pallas_src>
import functools
import math

import jax
import jax.numpy as jnp
from jax.experimental import pallas as pl
from jax.experimental.pallas import tpu as pltpu

# ----------------------------- model constants ------------------------------
C = 32          # core feature channels
DBINS = 96      # depth bins (DepthFocalLoss(96))
NA = 2          # anchors per location
NCLS = 3        # classes
TOPK = 20       # boxes returned by get_bboxes
STRIDE = 4      # total backbone stride
BBOX_CLIP = math.log(1000.0 / 16.0)   # clamp for dw/dh before exp

VMEM = functools.partial(pl.BlockSpec, memory_space=pltpu.MemorySpace.VMEM)


def _mxu(a, b):
    """bf16 MXU matmul with f32 accumulation."""
    return jnp.dot(a.astype(jnp.bfloat16), b.astype(jnp.bfloat16),
                   preferred_element_type=jnp.float32)


# ------------------------------ Pallas kernels -------------------------------
def _linear_kernel(x_ref, w_ref, b_ref, o_ref, *, relu):
    y = _mxu(x_ref[...], w_ref[...]) + b_ref[...]
    if relu:
        y = jnp.maximum(y, 0.0)
    o_ref[...] = y.astype(o_ref.dtype)


def linear(x, w, b, relu=False):
    """[M, K] @ [K, N] + b (fused bias + optional ReLU), whole arrays in VMEM."""
    m, n = x.shape[0], w.shape[1]
    return pl.pallas_call(
        functools.partial(_linear_kernel, relu=relu),
        out_shape=jax.ShapeDtypeStruct((m, n), jnp.float32),
        in_specs=[VMEM(), VMEM(), VMEM()],
        out_specs=VMEM(),
    )(x, w, b.reshape(1, n))


def _core_kernel(p_ref, w2_ref, b2_ref, dw_ref, db_ref, demb_ref, cam_ref,
                 wqkv_ref, wo_ref, w1_ref, b1_ref, w2f_ref, b2f_ref, o_ref,
                 *, scale):
    """conv2 + depth softmax/enhance + transformer block, fully fused (VMEM-resident)."""
    # conv2 as matmul + bias + ReLU (patches already im2col'd in glue)
    f2 = jnp.maximum(_mxu(p_ref[...], w2_ref[...]) + b2_ref[...], 0.0)

    # depth-bin logits + softmax over bins
    d = _mxu(f2, dw_ref[...]) + db_ref[...]
    d = d - jnp.max(d, axis=-1, keepdims=True)
    pe = jnp.exp(d)
    pe = pe * pl.reciprocal(jnp.sum(pe, axis=-1, keepdims=True), approx=True)

    # depth-aware feature enhancement + camera embedding (precomputed in glue)
    f_enh = f2 + _mxu(pe, demb_ref[...]) + cam_ref[...]

    # self-attention with fused QKV projection (+ residual)
    qkv = _mxu(f_enh, wqkv_ref[...])                 # (M, 3C)
    q = qkv[:, 0:C]
    k = qkv[:, C:2 * C]
    v = qkv[:, 2 * C:3 * C]
    s = _mxu(q, k.T) * scale
    s = s - jnp.max(s, axis=-1, keepdims=True)
    pa = jnp.exp(s)
    pa = pa * pl.reciprocal(jnp.sum(pa, axis=-1, keepdims=True), approx=True)
    f_attn = f_enh + _mxu(_mxu(pa, v), wo_ref[...])

    # FFN (+ residual) — residual add done in-kernel on VMEM-resident data
    ff = jnp.maximum(_mxu(f_attn, w1_ref[...]) + b1_ref[...], 0.0)
    o_ref[...] = (_mxu(ff, w2f_ref[...]) + b2f_ref[...] + f_attn).astype(o_ref.dtype)


def fused_core(p2, params, cam, m):
    return pl.pallas_call(
        functools.partial(_core_kernel, scale=1.0 / math.sqrt(C)),
        out_shape=jax.ShapeDtypeStruct((m, C), jnp.float32),
        in_specs=[VMEM()] * 13,
        out_specs=VMEM(),
    )(p2,
      params['conv2_w'], params['conv2_b'].reshape(1, C),
      params['depth_w'], params['depth_b'].reshape(1, DBINS),
      params['depth_emb'], cam,
      params['qkv_w'], params['attn_o_w'],
      params['ffn1_w'], params['ffn1_b'].reshape(1, 2 * C),
      params['ffn2_w'], params['ffn2_b'].reshape(1, C))


def _decode_kernel(cls_ref, reg_ref, anc_ref, sc_ref, box_ref, ix_ref):
    """Lane-dense decode: anchor axis (A) sits on lanes for every input/output."""
    logits = cls_ref[...]                                   # (NCLS, A)
    probs = pl.reciprocal(1.0 + jnp.exp(-logits), approx=True)   # sigmoid
    pmax = jnp.max(probs, axis=0, keepdims=True)            # (1, A)
    sc_ref[...] = pmax
    nc = logits.shape[0]
    row = jax.lax.broadcasted_iota(jnp.int32, logits.shape, 0)
    ix_ref[...] = jnp.min(jnp.where(probs >= pmax, row, nc), axis=0, keepdims=True)

    anc = anc_ref[...]                                      # (4, A): xa, ya, wa, ha
    xa, ya, wa, ha = anc[0:1], anc[1:2], anc[2:3], anc[3:4]
    reg = reg_ref[...]                                      # (4, A): dx, dy, dw, dh
    dx, dy = reg[0:1], reg[1:2]
    dw = jnp.minimum(reg[2:3], BBOX_CLIP)
    dh = jnp.minimum(reg[3:4], BBOX_CLIP)
    cx = xa + dx * wa
    cy = ya + dy * ha
    w = wa * jnp.exp(dw)
    h = ha * jnp.exp(dh)
    box_ref[...] = jnp.concatenate(
        [cx - 0.5 * w, cy - 0.5 * h, cx + 0.5 * w, cy + 0.5 * h], axis=0)


def decode(cls_t, reg_t, anc_t):
    """cls_t: (NCLS, A), reg_t: (4, A), anc_t: (4, A) -> scores (A,), boxes (A,4), idx (A,)."""
    A = cls_t.shape[1]
    sc, box, ix = pl.pallas_call(
        _decode_kernel,
        out_shape=(jax.ShapeDtypeStruct((1, A), jnp.float32),
                   jax.ShapeDtypeStruct((4, A), jnp.float32),
                   jax.ShapeDtypeStruct((1, A), jnp.int32)),
        in_specs=[VMEM(), VMEM(), VMEM()],
        out_specs=(VMEM(), VMEM(), VMEM()),
    )(cls_t, reg_t, anc_t)
    return sc[0], box.T, ix[0]


# --------------------------------- JAX glue ----------------------------------
def im2col(x, k, stride, pad):
    """x: (N, H, W, C) -> patches (N*Ho*Wo, k*k*C), plus output spatial shape."""
    # TODO(synk): at real MonoDTR image sizes, replace im2col with in-kernel shifted
    #             matmul accumulation to avoid the 9x HBM patch blow-up (hurts v5e most).
    N, H, W, Cc = x.shape
    xp = jnp.pad(x, ((0, 0), (pad, pad), (pad, pad), (0, 0)))
    Ho = (H + 2 * pad - k) // stride + 1
    Wo = (W + 2 * pad - k) // stride + 1
    cols = []
    for i in range(k):
        for j in range(k):
            cols.append(xp[:, i:i + Ho * stride:stride, j:j + Wo * stride:stride, :])
    patches = jnp.concatenate(cols, axis=-1)           # (N, Ho, Wo, k*k*C)
    return patches.reshape(N * Ho * Wo, k * k * Cc), (N, Ho, Wo)


def init_params(key):
    ks = jax.random.split(key, 16)

    def w(k, shape, scale=0.05):
        return (scale * jax.random.normal(k, shape)).astype(jnp.float32)

    z = lambda n: jnp.zeros((n,), jnp.float32)
    head_b = jnp.concatenate(
        [jnp.full((NA * NCLS,), -2.0, jnp.float32), z(NA * 4)])    # [cls_b | reg_b]
    return dict(
        conv1_w=w(ks[0], (3 * 3 * 3, C)), conv1_b=z(C),
        conv2_w=w(ks[1], (3 * 3 * C, C)), conv2_b=z(C),
        depth_w=w(ks[2], (C, DBINS)), depth_b=z(DBINS),
        depth_emb=w(ks[3], (DBINS, C)),
        cam_w=w(ks[4], (12, C)), cam_b=z(C),
        qkv_w=w(ks[5], (C, 3 * C)),                                # fused [wq | wk | wv]
        attn_o_w=w(ks[6], (C, C)),
        ffn1_w=w(ks[7], (C, 2 * C)), ffn1_b=z(2 * C),
        ffn2_w=w(ks[8], (2 * C, C)), ffn2_b=z(C),
        head_w=w(ks[9], (3 * 3 * C, NA * (NCLS + 4))),             # fused [cls_w | reg_w]
        head_b=head_b,
    )


def mono_core(params, img_nhwc, P2):
    # backbone conv1: stride-2 3x3 (im2col + fused matmul / bias / ReLU)
    p1, shp1 = im2col(img_nhwc, 3, 2, 1)
    f1 = linear(p1, params['conv1_w'], params['conv1_b'], relu=True)
    f1 = f1.reshape(shp1[0], shp1[1], shp1[2], C)
    p2, shp2 = im2col(f1, 3, 2, 1)

    # camera embedding: (1,12) @ (12,C) is too tiny for a kernel -> plain XLA
    cam = P2.reshape(1, 12) @ params['cam_w'] + params['cam_b'].reshape(1, C)

    # conv2 + depth softmax / enhance + DTR transformer block: ONE fused kernel
    m = shp2[0] * shp2[1] * shp2[2]
    feat = fused_core(p2, params, cam, m)
    return feat, shp2


def bbox_head(params, feat, shp):
    N, Ho, Wo = shp
    fmap = feat.reshape(N, Ho, Wo, C)
    p, _ = im2col(fmap, 3, 1, 1)
    # merged cls|reg head: one matmul, split columns in glue
    out = linear(p, params['head_w'], params['head_b'])       # (HW, NA*(NCLS+4))
    hw = out.shape[0]
    cls = out[:, :NA * NCLS].reshape(hw * NA, NCLS)
    reg = out[:, NA * NCLS:].reshape(hw * NA, 4)
    # transpose so the anchor axis is lane-dense for the decode kernel
    return cls.T, reg.T                                       # (NCLS, A), (4, A)


def get_anchor(Ho, Wo, stride=STRIDE, sizes=(16.0, 24.0)):
    """Static anchor centers / sizes, lane-dense layout (4, A): rows xa, ya, wa, ha."""
    ys = (jnp.arange(Ho, dtype=jnp.float32) + 0.5) * stride
    xs = (jnp.arange(Wo, dtype=jnp.float32) + 0.5) * stride
    cy, cx = jnp.meshgrid(ys, xs, indexing='ij')
    per_size = []
    for s in sizes:
        per_size.append(jnp.stack(
            [cx, cy, jnp.full_like(cx, s), jnp.full_like(cx, s)], axis=-1))
    anc = jnp.stack(per_size, axis=2)                          # (Ho, Wo, NA, 4)
    return anc.reshape(-1, 4).T                                # (4, A)


def monodtr_test_forward(params, left_images, P2):
    # MonoDTR.test_forward semantics (batch must be 1)
    assert left_images.shape[0] == 1
    img_nhwc = jnp.transpose(left_images, (0, 2, 3, 1))        # NCHW -> NHWC
    feat, shp = mono_core(params, img_nhwc, P2)
    cls_t, reg_t = bbox_head(params, feat, shp)
    anc_t = get_anchor(shp[1], shp[2])
    scores_all, boxes_all, idx_all = decode(cls_t, reg_t, anc_t)
    scores, order = jax.lax.top_k(scores_all, TOPK)
    bboxes = boxes_all[order]
    cls_indexes = idx_all[order]
    return scores, bboxes, cls_indexes


# ----------------------------------- main ------------------------------------
if __name__ == "__main__":
    key = jax.random.PRNGKey(0)
    k_img, k_par = jax.random.split(key)

    left_images = jax.random.normal(k_img, (1, 3, 32, 32), dtype=jnp.float32)  # NCHW
    P2 = jnp.array([[[700.0, 0.0, 16.0, 45.0],
                     [0.0, 700.0, 16.0, -0.3],
                     [0.0, 0.0, 1.0, 0.005]]], dtype=jnp.float32)              # (1, 3, 4)

    params = init_params(k_par)

    fwd = jax.jit(functools.partial(monodtr_test_forward, params))
    scores, bboxes, cls_indexes = fwd(left_images, P2)
    jax.block_until_ready((scores, bboxes, cls_indexes))

    assert scores.shape == (TOPK,)
    assert bboxes.shape == (TOPK, 4)
    assert cls_indexes.shape == (TOPK,)
    assert cls_indexes.dtype == jnp.int32
    print("KERNEL_OK")
</pallas_src>

<mosaic_0001>
module attributes {stable_mosaic.version = 11 : i64} {
  func.func @_linear_kernel(%arg0: memref<256x27xf32, #tpu.memory_space<vmem>>, %arg1: memref<27x32xf32, #tpu.memory_space<vmem>>, %arg2: memref<1x32xf32, #tpu.memory_space<vmem>>, %arg3: memref<256x32xf32, #tpu.memory_space<vmem>>) attributes {dimension_semantics = [], scalar_prefetch = 0 : i64, scratch_operands = 0 : i64, tpu.core_type = #tpu.core_type<tc>} {
    %c0 = arith.constant 0 : index
    %c0_0 = arith.constant 0 : index
    %0 = vector.load %arg0[%c0, %c0_0] : memref<256x27xf32, #tpu.memory_space<vmem>>, vector<256x27xf32>
    %c0_1 = arith.constant 0 : index
    %c0_2 = arith.constant 0 : index
    %1 = vector.load %arg1[%c0_1, %c0_2] : memref<27x32xf32, #tpu.memory_space<vmem>>, vector<27x32xf32>
    %2 = arith.truncf %0 : vector<256x27xf32> to vector<256x27xbf16>
    %3 = arith.truncf %1 : vector<27x32xf32> to vector<27x32xbf16>
    %cst = arith.constant dense<0.000000e+00> : vector<256x32xf32>
    %4 = tpu.matmul %2, %3, %cst {dimension_numbers = #tpu.dot_dimension_numbers<[1], [0], [0], [1], [0, 0, 1, 1], [], []>} : vector<256x27xbf16>, vector<27x32xbf16>, vector<256x32xf32> -> vector<256x32xf32>
    %c0_3 = arith.constant 0 : index
    %c0_4 = arith.constant 0 : index
    %5 = vector.load %arg2[%c0_3, %c0_4] : memref<1x32xf32, #tpu.memory_space<vmem>>, vector<1x32xf32>
    %6 = vector.broadcast %5 : vector<1x32xf32> to vector<256x32xf32>
    %7 = arith.addf %4, %6 : vector<256x32xf32>
    %cst_5 = arith.constant 0.000000e+00 : f32
    %8 = vector.broadcast %cst_5 : f32 to vector<256x32xf32>
    %9 = arith.maximumf %7, %8 : vector<256x32xf32>
    %c0_6 = arith.constant 0 : index
    %c0_7 = arith.constant 0 : index
    %10 = vector.load %arg3[%c0_6, %c0_7] : memref<256x32xf32, #tpu.memory_space<vmem>>, vector<256x32xf32>
    tpu.vector_store %arg3[%c0_6, %c0_7], %9 {strides = array<i32>} : memref<256x32xf32, #tpu.memory_space<vmem>>, vector<256x32xf32>,
    return
  }
}

module attributes {stable_mosaic.version = 11 : i64} {
  func.func @_core_kernel(%arg0: memref<64x288xf32, #tpu.memory_space<vmem>>, %arg1: memref<288x32xf32, #tpu.memory_space<vmem>>, %arg2: memref<1x32xf32, #tpu.memory_space<vmem>>, %arg3: memref<32x96xf32, #tpu.memory_space<vmem>>, %arg4: memref<1x96xf32, #tpu.memory_space<vmem>>, %arg5: memref<96x32xf32, #tpu.memory_space<vmem>>, %arg6: memref<1x32xf32, #tpu.memory_space<vmem>>, %arg7: memref<32x96xf32, #tpu.memory_space<vmem>>, %arg8: memref<32x32xf32, #tpu.memory_space<vmem>>, %arg9: memref<32x64xf32, #tpu.memory_space<vmem>>, %arg10: memref<1x64xf32, #tpu.memory_space<vmem>>, %arg11: memref<64x32xf32, #tpu.memory_space<vmem>>, %arg12: memref<1x32xf32, #tpu.memory_space<vmem>>, %arg13: memref<64x32xf32, #tpu.memory_space<vmem>>) attributes {dimension_semantics = [], scalar_prefetch = 0 : i64, scratch_operands = 0 : i64, tpu.core_type = #tpu.core_type<tc>} {
    %c0 = arith.constant 0 : index
    %c0_0 = arith.constant 0 : index
    %0 = vector.load %arg0[%c0, %c0_0] : memref<64x288xf32, #tpu.memory_space<vmem>>, vector<64x288xf32>
    %c0_1 = arith.constant 0 : index
    %c0_2 = arith.constant 0 : index
    %1 = vector.load %arg1[%c0_1, %c0_2] : memref<288x32xf32, #tpu.memory_space<vmem>>, vector<288x32xf32>
    %2 = arith.truncf %0 : vector<64x288xf32> to vector<64x288xbf16>
    %3 = arith.truncf %1 : vector<288x32xf32> to vector<288x32xbf16>
    %cst = arith.constant dense<0.000000e+00> : vector<64x32xf32>
    %4 = tpu.matmul %2, %3, %cst {dimension_numbers = #tpu.dot_dimension_numbers<[1], [0], [0], [1], [0, 0, 1, 1], [], []>} : vector<64x288xbf16>, vector<288x32xbf16>, vector<64x32xf32> -> vector<64x32xf32>
    %c0_3 = arith.constant 0 : index
    %c0_4 = arith.constant 0 : index
    %5 = vector.load %arg2[%c0_3, %c0_4] : memref<1x32xf32, #tpu.memory_space<vmem>>, vector<1x32xf32>
    %6 = vector.broadcast %5 : vector<1x32xf32> to vector<64x32xf32>
    %7 = arith.addf %4, %6 : vector<64x32xf32>
    %cst_5 = arith.constant 0.000000e+00 : f32
    %8 = vector.broadcast %cst_5 : f32 to vector<64x32xf32>
    %9 = arith.maximumf %7, %8 : vector<64x32xf32>
    %c0_6 = arith.constant 0 : index
    %c0_7 = arith.constant 0 : index
    %10 = vector.load %arg3[%c0_6, %c0_7] : memref<32x96xf32, #tpu.memory_space<vmem>>, vector<32x96xf32>
    %11 = arith.truncf %9 : vector<64x32xf32> to vector<64x32xbf16>
    %12 = arith.truncf %10 : vector<32x96xf32> to vector<32x96xbf16>
    %cst_8 = arith.constant dense<0.000000e+00> : vector<64x96xf32>
    %13 = tpu.matmul %11, %12, %cst_8 {dimension_numbers = #tpu.dot_dimension_numbers<[1], [0], [0], [1], [0, 0, 1, 1], [], []>} : vector<64x32xbf16>, vector<32x96xbf16>, vector<64x96xf32> -> vector<64x96xf32>
    %c0_9 = arith.constant 0 : index
    %c0_10 = arith.constant 0 : index
    %14 = vector.load %arg4[%c0_9, %c0_10] : memref<1x96xf32, #tpu.memory_space<vmem>>, vector<1x96xf32>
    %15 = vector.broadcast %14 : vector<1x96xf32> to vector<64x96xf32>
    %16 = arith.addf %13, %15 : vector<64x96xf32>
    %cst_11 = arith.constant dense<0xFF800000> : vector<64xf32>
    %17 = vector.multi_reduction <maximumf>, %16, %cst_11 [1] : vector<64x96xf32> to vector<64xf32>
    %18 = vector.shape_cast %17 : vector<64xf32> to vector<64x1xf32>
    %19 = vector.broadcast %18 : vector<64x1xf32> to vector<64x96xf32>
    %20 = arith.subf %16, %19 : vector<64x96xf32>
    %21 = math.exp %20 : vector<64x96xf32>
    %cst_12 = arith.constant dense<0.000000e+00> : vector<64xf32>
    %22 = vector.multi_reduction <add>, %21, %cst_12 [1] : vector<64x96xf32> to vector<64xf32>
    %23 = vector.shape_cast %22 : vector<64xf32> to vector<64x1xf32>
    %24 = tpu.reciprocal %23 {approx = true} : vector<64x1xf32> -> vector<64x1xf32>
    %25 = vector.broadcast %24 : vector<64x1xf32> to vector<64x96xf32>
    %26 = arith.mulf %21, %25 : vector<64x96xf32>
    %c0_13 = arith.constant 0 : index
    %c0_14 = arith.constant 0 : index
    %27 = vector.load %arg5[%c0_13, %c0_14] : memref<96x32xf32, #tpu.memory_space<vmem>>, vector<96x32xf32>
    %28 = arith.truncf %26 : vector<64x96xf32> to vector<64x96xbf16>
    %29 = arith.truncf %27 : vector<96x32xf32> to vector<96x32xbf16>
    %cst_15 = arith.constant dense<0.000000e+00> : vector<64x32xf32>
    %30 = tpu.matmul %28, %29, %cst_15 {dimension_numbers = #tpu.dot_dimension_numbers<[1], [0], [0], [1], [0, 0, 1, 1], [], []>} : vector<64x96xbf16>, vector<96x32xbf16>, vector<64x32xf32> -> vector<64x32xf32>
    %31 = arith.addf %9, %30 : vector<64x32xf32>
    %c0_16 = arith.constant 0 : index
    %c0_17 = arith.constant 0 : index
    %32 = vector.load %arg6[%c0_16, %c0_17] : memref<1x32xf32, #tpu.memory_space<vmem>>, vector<1x32xf32>
    %33 = vector.broadcast %32 : vector<1x32xf32> to vector<64x32xf32>
    %34 = arith.addf %31, %33 : vector<64x32xf32>
    %c0_18 = arith.constant 0 : index
    %c0_19 = arith.constant 0 : index
    %35 = vector.load %arg7[%c0_18, %c0_19] : memref<32x96xf32, #tpu.memory_space<vmem>>, vector<32x96xf32>
    %36 = arith.truncf %34 : vector<64x32xf32> to vector<64x32xbf16>
    %37 = arith.truncf %35 : vector<32x96xf32> to vector<32x96xbf16>
    %cst_20 = arith.constant dense<0.000000e+00> : vector<64x96xf32>
    %38 = tpu.matmul %36, %37, %cst_20 {dimension_numbers = #tpu.dot_dimension_numbers<[1], [0], [0], [1], [0, 0, 1, 1], [], []>} : vector<64x32xbf16>, vector<32x96xbf16>, vector<64x96xf32> -> vector<64x96xf32>
    %39 = vector.extract_strided_slice %38 {offsets = [0, 0], sizes = [64, 32], strides = [1, 1]} : vector<64x96xf32> to vector<64x32xf32>
    %40 = vector.extract_strided_slice %38 {offsets = [0, 32], sizes = [64, 32], strides = [1, 1]} : vector<64x96xf32> to vector<64x32xf32>
    %41 = vector.extract_strided_slice %38 {offsets = [0, 64], sizes = [64, 32], strides = [1, 1]} : vector<64x96xf32> to vector<64x32xf32>
    %42 = tpu.transpose %40, [1, 0] : vector<64x32xf32> -> vector<32x64xf32>
    %43 = arith.truncf %39 : vector<64x32xf32> to vector<64x32xbf16>
    %44 = arith.truncf %42 : vector<32x64xf32> to vector<32x64xbf16>
    %cst_21 = arith.constant dense<0.000000e+00> : vector<64x64xf32>
    %45 = tpu.matmul %43, %44, %cst_21 {dimension_numbers = #tpu.dot_dimension_numbers<[1], [0], [0], [1], [0, 0, 1, 1], [], []>} : vector<64x32xbf16>, vector<32x64xbf16>, vector<64x64xf32> -> vector<64x64xf32>
    %cst_22 = arith.constant 0.176776692 : f32
    %46 = vector.broadcast %cst_22 : f32 to vector<64x64xf32>
    %47 = arith.mulf %45, %46 : vector<64x64xf32>
    %cst_23 = arith.constant dense<0xFF800000> : vector<64xf32>
    %48 = vector.multi_reduction <maximumf>, %47, %cst_23 [1] : vector<64x64xf32> to vector<64xf32>
    %49 = vector.shape_cast %48 : vector<64xf32> to vector<64x1xf32>
    %50 = vector.broadcast %49 : vector<64x1xf32> to vector<64x64xf32>
    %51 = arith.subf %47, %50 : vector<64x64xf32>
    %52 = math.exp %51 : vector<64x64xf32>
    %cst_24 = arith.constant dense<0.000000e+00> : vector<64xf32>
    %53 = vector.multi_reduction <add>, %52, %cst_24 [1] : vector<64x64xf32> to vector<64xf32>
    %54 = vector.shape_cast %53 : vector<64xf32> to vector<64x1xf32>
    %55 = tpu.reciprocal %54 {approx = true} : vector<64x1xf32> -> vector<64x1xf32>
    %56 = vector.broadcast %55 : vector<64x1xf32> to vector<64x64xf32>
    %57 = arith.mulf %52, %56 : vector<64x64xf32>
    %58 = arith.truncf %57 : vector<64x64xf32> to vector<64x64xbf16>
    %59 = arith.truncf %41 : vector<64x32xf32> to vector<64x32xbf16>
    %cst_25 = arith.constant dense<0.000000e+00> : vector<64x32xf32>
    %60 = tpu.matmul %58, %59, %cst_25 {dimension_numbers = #tpu.dot_dimension_numbers<[1], [0], [0], [1], [0, 0, 1, 1], [], []>} : vector<64x64xbf16>, vector<64x32xbf16>, vector<64x32xf32> -> vector<64x32xf32>
    %c0_26 = arith.constant 0 : index
    %c0_27 = arith.constant 0 : index
    %61 = vector.load %arg8[%c0_26, %c0_27] : memref<32x32xf32, #tpu.memory_space<vmem>>, vector<32x32xf32>
    %62 = arith.truncf %60 : vector<64x32xf32> to vector<64x32xbf16>
    %63 = arith.truncf %61 : vector<32x32xf32> to vector<32x32xbf16>
    %cst_28 = arith.constant dense<0.000000e+00> : vector<64x32xf32>
    %64 = tpu.matmul %62, %63, %cst_28 {dimension_numbers = #tpu.dot_dimension_numbers<[1], [0], [0], [1], [0, 0, 1, 1], [], []>} : vector<64x32xbf16>, vector<32x32xbf16>, vector<64x32xf32> -> vector<64x32xf32>
    %65 = arith.addf %34, %64 : vector<64x32xf32>
    %c0_29 = arith.constant 0 : index
    %c0_30 = arith.constant 0 : index
    %66 = vector.load %arg9[%c0_29, %c0_30] : memref<32x64xf32, #tpu.memory_space<vmem>>, vector<32x64xf32>
    %67 = arith.truncf %65 : vector<64x32xf32> to vector<64x32xbf16>
    %68 = arith.truncf %66 : vector<32x64xf32> to vector<32x64xbf16>
    %cst_31 = arith.constant dense<0.000000e+00> : vector<64x64xf32>
    %69 = tpu.matmul %67, %68, %cst_31 {dimension_numbers = #tpu.dot_dimension_numbers<[1], [0], [0], [1], [0, 0, 1, 1], [], []>} : vector<64x32xbf16>, vector<32x64xbf16>, vector<64x64xf32> -> vector<64x64xf32>
    %c0_32 = arith.constant 0 : index
    %c0_33 = arith.constant 0 : index
    %70 = vector.load %arg10[%c0_32, %c0_33] : memref<1x64xf32, #tpu.memory_space<vmem>>, vector<1x64xf32>
    %71 = vector.broadcast %70 : vector<1x64xf32> to vector<64x64xf32>
    %72 = arith.addf %69, %71 : vector<64x64xf32>
    %cst_34 = arith.constant 0.000000e+00 : f32
    %73 = vector.broadcast %cst_34 : f32 to vector<64x64xf32>
    %74 = arith.maximumf %72, %73 : vector<64x64xf32>
    %c0_35 = arith.constant 0 : index
    %c0_36 = arith.constant 0 : index
    %75 = vector.load %arg11[%c0_35, %c0_36] : memref<64x32xf32, #tpu.memory_space<vmem>>, vector<64x32xf32>
    %76 = arith.truncf %74 : vector<64x64xf32> to vector<64x64xbf16>
    %77 = arith.truncf %75 : vector<64x32xf32> to vector<64x32xbf16>
    %cst_37 = arith.constant dense<0.000000e+00> : vector<64x32xf32>
    %78 = tpu.matmul %76, %77, %cst_37 {dimension_numbers = #tpu.dot_dimension_numbers<[1], [0], [0], [1], [0, 0, 1, 1], [], []>} : vector<64x64xbf16>, vector<64x32xbf16>, vector<64x32xf32> -> vector<64x32xf32>
    %c0_38 = arith.constant 0 : index
    %c0_39 = arith.constant 0 : index
    %79 = vector.load %arg12[%c0_38, %c0_39] : memref<1x32xf32, #tpu.memory_space<vmem>>, vector<1x32xf32>
    %80 = vector.broadcast %79 : vector<1x32xf32> to vector<64x32xf32>
    %81 = arith.addf %78, %80 : vector<64x32xf32>
    %82 = arith.addf %81, %65 : vector<64x32xf32>
    %c0_40 = arith.constant 0 : index
    %c0_41 = arith.constant 0 : index
    %83 = vector.load %arg13[%c0_40, %c0_41] : memref<64x32xf32, #tpu.memory_space<vmem>>, vector<64x32xf32>
    tpu.vector_store %arg13[%c0_40, %c0_41], %82 {strides = array<i32>} : memref<64x32xf32, #tpu.memory_space<vmem>>, vector<64x32xf32>,
    return
  }
}

module attributes {stable_mosaic.version = 11 : i64} {
  func.func @_linear_kernel(%arg0: memref<64x288xf32, #tpu.memory_space<vmem>>, %arg1: memref<288x14xf32, #tpu.memory_space<vmem>>, %arg2: memref<1x14xf32, #tpu.memory_space<vmem>>, %arg3: memref<64x14xf32, #tpu.memory_space<vmem>>) attributes {dimension_semantics = [], scalar_prefetch = 0 : i64, scratch_operands = 0 : i64, tpu.core_type = #tpu.core_type<tc>} {
    %c0 = arith.constant 0 : index
    %c0_0 = arith.constant 0 : index
    %0 = vector.load %arg0[%c0, %c0_0] : memref<64x288xf32, #tpu.memory_space<vmem>>, vector<64x288xf32>
    %c0_1 = arith.constant 0 : index
    %c0_2 = arith.constant 0 : index
    %1 = vector.load %arg1[%c0_1, %c0_2] : memref<288x14xf32, #tpu.memory_space<vmem>>, vector<288x14xf32>
    %2 = arith.truncf %0 : vector<64x288xf32> to vector<64x288xbf16>
    %3 = arith.truncf %1 : vector<288x14xf32> to vector<288x14xbf16>
    %cst = arith.constant dense<0.000000e+00> : vector<64x14xf32>
    %4 = tpu.matmul %2, %3, %cst {dimension_numbers = #tpu.dot_dimension_numbers<[1], [0], [0], [1], [0, 0, 1, 1], [], []>} : vector<64x288xbf16>, vector<288x14xbf16>, vector<64x14xf32> -> vector<64x14xf32>
    %c0_3 = arith.constant 0 : index
    %c0_4 = arith.constant 0 : index
    %5 = vector.load %arg2[%c0_3, %c0_4] : memref<1x14xf32, #tpu.memory_space<vmem>>, vector<1x14xf32>
    %6 = vector.broadcast %5 : vector<1x14xf32> to vector<64x14xf32>
    %7 = arith.addf %4, %6 : vector<64x14xf32>
    %c0_5 = arith.constant 0 : index
    %c0_6 = arith.constant 0 : index
    %8 = vector.load %arg3[%c0_5, %c0_6] : memref<64x14xf32, #tpu.memory_space<vmem>>, vector<64x14xf32>
    tpu.vector_store %arg3[%c0_5, %c0_6], %7 {strides = array<i32>} : memref<64x14xf32, #tpu.memory_space<vmem>>, vector<64x14xf32>,
    return
  }
}

module attributes {stable_mosaic.version = 11 : i64} {
  func.func @_decode_kernel(%arg0: memref<3x128xf32, #tpu.memory_space<vmem>>, %arg1: memref<4x128xf32, #tpu.memory_space<vmem>>, %arg2: memref<4x128xf32, #tpu.memory_space<vmem>>, %arg3: memref<1x128xf32, #tpu.memory_space<vmem>>, %arg4: memref<4x128xf32, #tpu.memory_space<vmem>>, %arg5: memref<1x128xi32, #tpu.memory_space<vmem>>) attributes {dimension_semantics = [], scalar_prefetch = 0 : i64, scratch_operands = 0 : i64, tpu.core_type = #tpu.core_type<tc>} {
    %c0 = arith.constant 0 : index
    %c0_0 = arith.constant 0 : index
    %0 = vector.load %arg0[%c0, %c0_0] : memref<3x128xf32, #tpu.memory_space<vmem>>, vector<3x128xf32>
    %cst = arith.constant 0.000000e+00 : f32
    %1 = vector.broadcast %cst : f32 to vector<3x128xf32>
    %2 = arith.subf %1, %0 : vector<3x128xf32>
    %3 = math.exp %2 : vector<3x128xf32>
    %cst_1 = arith.constant 1.000000e+00 : f32
    %4 = vector.broadcast %cst_1 : f32 to vector<3x128xf32>
    %5 = arith.addf %4, %3 : vector<3x128xf32>
    %6 = tpu.reciprocal %5 {approx = true} : vector<3x128xf32> -> vector<3x128xf32>
    %cst_2 = arith.constant dense<0xFF800000> : vector<128xf32>
    %7 = vector.multi_reduction <maximumf>, %6, %cst_2 [0] : vector<3x128xf32> to vector<128xf32>
    %8 = vector.shape_cast %7 : vector<128xf32> to vector<1x128xf32>
    %c0_3 = arith.constant 0 : index
    %c0_4 = arith.constant 0 : index
    %9 = vector.load %arg3[%c0_3, %c0_4] : memref<1x128xf32, #tpu.memory_space<vmem>>, vector<1x128xf32>
    tpu.vector_store %arg3[%c0_3, %c0_4], %8 {strides = array<i32>} : memref<1x128xf32, #tpu.memory_space<vmem>>, vector<1x128xf32>,
    %10 = tpu.iota {dimensions = array<i32: 0>} : vector<3x128xi32>
    %11 = vector.broadcast %8 : vector<1x128xf32> to vector<3x128xf32>
    %12 = arith.cmpf oge, %6, %11 : vector<3x128xf32>
    %c3_i32 = arith.constant 3 : i32
    %13 = vector.broadcast %c3_i32 : i32 to vector<3x128xi32>
    %14 = arith.select %12, %10, %13 : vector<3x128xi1>, vector<3x128xi32>
    %cst_5 = arith.constant dense<2147483647> : vector<128xi32>
    %15 = vector.multi_reduction <minsi>, %14, %cst_5 [0] : vector<3x128xi32> to vector<128xi32>
    %16 = vector.shape_cast %15 : vector<128xi32> to vector<1x128xi32>
    %c0_6 = arith.constant 0 : index
    %c0_7 = arith.constant 0 : index
    %17 = vector.load %arg5[%c0_6, %c0_7] : memref<1x128xi32, #tpu.memory_space<vmem>>, vector<1x128xi32>
    tpu.vector_store %arg5[%c0_6, %c0_7], %16 {strides = array<i32>} : memref<1x128xi32, #tpu.memory_space<vmem>>, vector<1x128xi32>,
    %c0_8 = arith.constant 0 : index
    %c0_9 = arith.constant 0 : index
    %18 = vector.load %arg2[%c0_8, %c0_9] : memref<4x128xf32, #tpu.memory_space<vmem>>, vector<4x128xf32>
    %19 = vector.extract_strided_slice %18 {offsets = [0, 0], sizes = [1, 128], strides = [1, 1]} : vector<4x128xf32> to vector<1x128xf32>
    %20 = vector.extract_strided_slice %18 {offsets = [1, 0], sizes = [1, 128], strides = [1, 1]} : vector<4x128xf32> to vector<1x128xf32>
    %21 = vector.extract_strided_slice %18 {offsets = [2, 0], sizes = [1, 128], strides = [1, 1]} : vector<4x128xf32> to vector<1x128xf32>
    %22 = vector.extract_strided_slice %18 {offsets = [3, 0], sizes = [1, 128], strides = [1, 1]} : vector<4x128xf32> to vector<1x128xf32>
    %c0_10 = arith.constant 0 : index
    %c0_11 = arith.constant 0 : index
    %23 = vector.load %arg1[%c0_10, %c0_11] : memref<4x128xf32, #tpu.memory_space<vmem>>, vector<4x128xf32>
    %24 = vector.extract_strided_slice %23 {offsets = [0, 0], sizes = [1, 128], strides = [1, 1]} : vector<4x128xf32> to vector<1x128xf32>
    %25 = vector.extract_strided_slice %23 {offsets = [1, 0], sizes = [1, 128], strides = [1, 1]} : vector<4x128xf32> to vector<1x128xf32>
    %26 = vector.extract_strided_slice %23 {offsets = [2, 0], sizes = [1, 128], strides = [1, 1]} : vector<4x128xf32> to vector<1x128xf32>
    %cst_12 = arith.constant 4.13516665 : f32
    %27 = vector.broadcast %cst_12 : f32 to vector<1x128xf32>
    %28 = arith.minimumf %26, %27 : vector<1x128xf32>
    %29 = vector.extract_strided_slice %23 {offsets = [3, 0], sizes = [1, 128], strides = [1, 1]} : vector<4x128xf32> to vector<1x128xf32>
    %cst_13 = arith.constant 4.13516665 : f32
    %30 = vector.broadcast %cst_13 : f32 to vector<1x128xf32>
    %31 = arith.minimumf %29, %30 : vector<1x128xf32>
    %32 = arith.mulf %24, %21 : vector<1x128xf32>
    %33 = arith.addf %19, %32 : vector<1x128xf32>
    %34 = arith.mulf %25, %22 : vector<1x128xf32>
    %35 = arith.addf %20, %34 : vector<1x128xf32>
    %36 = math.exp %28 : vector<1x128xf32>
    %37 = arith.mulf %21, %36 : vector<1x128xf32>
    %38 = math.exp %31 : vector<1x128xf32>
    %39 = arith.mulf %22, %38 : vector<1x128xf32>
    %cst_14 = arith.constant 5.000000e-01 : f32
    %40 = vector.broadcast %cst_14 : f32 to vector<1x128xf32>
    %41 = arith.mulf %40, %37 : vector<1x128xf32>
    %42 = arith.subf %33, %41 : vector<1x128xf32>
    %cst_15 = arith.constant 5.000000e-01 : f32
    %43 = vector.broadcast %cst_15 : f32 to vector<1x128xf32>
    %44 = arith.mulf %43, %39 : vector<1x128xf32>
    %45 = arith.subf %35, %44 : vector<1x128xf32>
    %cst_16 = arith.constant 5.000000e-01 : f32
    %46 = vector.broadcast %cst_16 : f32 to vector<1x128xf32>
    %47 = arith.mulf %46, %37 : vector<1x128xf32>
    %48 = arith.addf %33, %47 : vector<1x128xf32>
    %cst_17 = arith.constant 5.000000e-01 : f32
    %49 = vector.broadcast %cst_17 : f32 to vector<1x128xf32>
    %50 = arith.mulf %49, %39 : vector<1x128xf32>
    %51 = arith.addf %35, %50 : vector<1x128xf32>
    %52 = tpu.concatenate %42, %45, %48, %51 in 0 : vector<1x128xf32>, vector<1x128xf32>, vector<1x128xf32>, vector<1x128xf32> -> vector<4x128xf32>
    %c0_18 = arith.constant 0 : index
    %c0_19 = arith.constant 0 : index
    %53 = vector.load %arg4[%c0_18, %c0_19] : memref<4x128xf32, #tpu.memory_space<vmem>>, vector<4x128xf32>
    tpu.vector_store %arg4[%c0_18, %c0_19], %52 {strides = array<i32>} : memref<4x128xf32, #tpu.memory_space<vmem>>, vector<4x128xf32>,
    return
  }
}

</mosaic_0001>

<llo_original>
// kernel: monodtr_test_forward.4
$region0: #{monodtr_test_forward.4}
  #allocation0 [shape = 'u32[]', space=smem, size = 0x4, offset = 0x4, fixed_abs, tag = 'smem constant byte address 0x4 - core index']
  #allocation1 [shape = 'u32[72,128]{1,0:T(1,128)}', space=vmem, size = 0x9000, scoped, tag = 'internal scratch']
  %s0 = inlined_call_operand.vmem [shape: f32[256,27], index: 0, kind: input, shape index: {}]
  %s1 = inlined_call_operand.vmem [shape: f32[27,32], index: 1, kind: input, shape index: {}]
  %s2 = inlined_call_operand.vmem [shape: f32[1,32], index: 2, kind: input, shape index: {}]
  %s3 = inlined_call_operand.vmem [shape: f32[256,32], index: 3, kind: output, shape index: {}]
  %s4 = sld [smem:[#allocation0]]
  $region22: #{monodtr_test_forward.4} parent=0
    _
  %s6 = ssub.s32 1, %s4
  %s7 = scalar_select 0, %s6, %s4
  // Predicated region
  $region2: #{monodtr_test_forward.4} parent=0 // pred_check
    _
  $region3: #{monodtr_test_forward.4} parent=0 // pred_check_branch
    %9 = sbr.rel (0) target = $region5
  $region4: #{monodtr_test_forward.4} parent=0 // pred_region
    _
  $region5: #{monodtr_test_forward.4} parent=0 // pred_fallthru
    _
  // Predicated region
  $region6: #{monodtr_test_forward.4} parent=0 // pred_check
    _
  $region7: #{monodtr_test_forward.4} parent=0 // pred_check_branch
    %11 = sbr.rel (0) target = $region9
  $region8: #{monodtr_test_forward.4} parent=0 // pred_region
    _
  $region9: #{monodtr_test_forward.4} parent=0 // pred_fallthru
    _
  // Predicated region
  $region10: #{monodtr_test_forward.4} parent=0 // pred_check
    _
  $region11: #{monodtr_test_forward.4} parent=0 // pred_check_branch
    %13 = sbr.rel (0) target = $region13
  $region12: #{monodtr_test_forward.4} parent=0 // pred_region
    _
  $region13: #{monodtr_test_forward.4} parent=0 // pred_fallthru
    _
  %v15 = vld [vmem:[%s0] sm:$0xff]
  %v16 = vld [vmem:[%s0 + $0x8] sm:$0xff]
  %v17 = vld [vmem:[%s0 + $0x10] sm:$0xff]
  %v18 = vld [vmem:[%s0 + $0x18] sm:$0xff]
  %v19 = vld [vmem:[%s0 + $0x20] sm:$0xff]
  %v20 = vld [vmem:[%s0 + $0x28] sm:$0xff]
  %v21 = vld [vmem:[%s0 + $0x30] sm:$0xff]
  %v22 = vld [vmem:[%s0 + $0x38] sm:$0xff]
  %v23 = vld [vmem:[%s0 + $0x40] sm:$0xff]
  %v24 = vld [vmem:[%s0 + $0x48] sm:$0xff]
  %v25 = vld [vmem:[%s0 + $0x50] sm:$0xff]
  %v26 = vld [vmem:[%s0 + $0x58] sm:$0xff]
  %v27 = vld [vmem:[%s0 + $0x60] sm:$0xff]
  %v28 = vld [vmem:[%s0 + $0x68] sm:$0xff]
  %v29 = vld [vmem:[%s0 + $0x70] sm:$0xff]
  %v30 = vld [vmem:[%s0 + $0x78] sm:$0xff]
  %v31 = vld [vmem:[%s0 + $0x80] sm:$0xff]
  %v32 = vld [vmem:[%s0 + $0x88] sm:$0xff]
  %v33 = vld [vmem:[%s0 + $0x90] sm:$0xff]
  %v34 = vld [vmem:[%s0 + $0x98] sm:$0xff]
  %v35 = vld [vmem:[%s0 + $0xa0] sm:$0xff]
  %v36 = vld [vmem:[%s0 + $0xa8] sm:$0xff]
  %v37 = vld [vmem:[%s0 + $0xb0] sm:$0xff]
  %v38 = vld [vmem:[%s0 + $0xb8] sm:$0xff]
  %v39 = vld [vmem:[%s0 + $0xc0] sm:$0xff]
  %v40 = vld [vmem:[%s0 + $0xc8] sm:$0xff]
  %v41 = vld [vmem:[%s0 + $0xd0] sm:$0xff]
  %v42 = vld [vmem:[%s0 + $0xd8] sm:$0xff]
  %v43 = vld [vmem:[%s0 + $0xe0] sm:$0xff]
  %v44 = vld [vmem:[%s0 + $0xe8] sm:$0xff]
  %v45 = vld [vmem:[%s0 + $0xf0] sm:$0xff]
  %v46 = vld [vmem:[%s0 + $0xf8] sm:$0xff]
  %v47 = vld [vmem:[%s1] sm:$0xff]
  %v48 = vld [vmem:[%s1 + $0x8] sm:$0xff]
  %v49 = vld [vmem:[%s1 + $0x10] sm:$0xff]
  %v50 = vld [vmem:[%s1 + $0x18] sm:$0x7]
  %v51 = vpack.c.bf16 %v16, %v15
  %v52 = vpack.c.bf16 %v18, %v17
  %v53 = vpack.c.bf16 %v20, %v19
  %v54 = vpack.c.bf16 %v22, %v21
  %v55 = vpack.c.bf16 %v24, %v23
  %v56 = vpack.c.bf16 %v26, %v25
  %v57 = vpack.c.bf16 %v28, %v27
  %v58 = vpack.c.bf16 %v30, %v29
  %v59 = vpack.c.bf16 %v32, %v31
  %v60 = vpack.c.bf16 %v34, %v33
  %v61 = vpack.c.bf16 %v36, %v35
  %v62 = vpack.c.bf16 %v38, %v37
  %v63 = vpack.c.bf16 %v40, %v39
  %v64 = vpack.c.bf16 %v42, %v41
  %v65 = vpack.c.bf16 %v44, %v43
  %v66 = vpack.c.bf16 %v46, %v45
  %v67 = vpack.c.bf16 %v48, %v47
  %v68 = vpack.c.bf16 %v50, %v49
  %v69 = vld [vmem:[%s2] sm:$0x1]
  %v71 = vperm.slane %v69, 0
  %vm73 = vcmask 220160
  %v75 = vsel %vm73, %v51, 0
  %v78 = vsel %vm73, %v52, 0
  %v81 = vsel %vm73, %v53, 0
  %v84 = vsel %vm73, %v54, 0
  %v87 = vsel %vm73, %v55, 0
  %v90 = vsel %vm73, %v56, 0
  %v93 = vsel %vm73, %v57, 0
  %v96 = vsel %vm73, %v58, 0
  %v99 = vsel %vm73, %v59, 0
  %v102 = vsel %vm73, %v60, 0
  %v105 = vsel %vm73, %v61, 0
  %v108 = vsel %vm73, %v62, 0
  %v111 = vsel %vm73, %v63, 0
  %v114 = vsel %vm73, %v64, 0
  %v117 = vsel %vm73, %v65, 0
  %v120 = vsel %vm73, %v66, 0
  %vm122 = vcmask 1044480
  %vm123 = vcmask 1045504
  %v124 = vsel %vm122, 4294967295, 65535
  %v125 = vsel %vm123, %v124, 0
  %v127 = vand.u32 %v68, %v125
  %129 = vmatpush.bf16.msra.mxu0 0
  %130 = vmatpush.bf16.msra.mxu0 0
  %131 = vmatpush.bf16.msra.mxu0 0
  %132 = vmatpush.bf16.msra.mxu0 0
  %133 = vmatpush.bf16.msra.mxu0 0
  %134 = vmatpush.bf16.msra.mxu0 0
  %135 = vmatpush.bf16.msra.mxu0 %v127
  %136 = vmatpush.bf16.msra.mxu0 %v67
  %137 = vmatmul.bf16.gmra.mxu0 %v75
  %v138 = vpop.f32.mrf.mxu0
  %v139 = vadd.f32 %v71, %v138
  %v140 = vpop.f32.mrf.mxu0
  %v141 = vadd.f32 %v71, %v140
  %142 = vmatmul.bf16.gmra.mxu0 %v78
  %v143 = vpop.f32.mrf.mxu0
  %v144 = vadd.f32 %v71, %v143
  %v145 = vpop.f32.mrf.mxu0
  %v146 = vadd.f32 %v71, %v145
  %147 = vmatmul.bf16.gmra.mxu0 %v81
  %v148 = vpop.f32.mrf.mxu0
  %v149 = vadd.f32 %v71, %v148
  %v150 = vpop.f32.mrf.mxu0
  %v151 = vadd.f32 %v71, %v150
  %152 = vmatmul.bf16.gmra.mxu0 %v84
  %v153 = vpop.f32.mrf.mxu0
  %v154 = vadd.f32 %v71, %v153
  %v155 = vpop.f32.mrf.mxu0
  %v156 = vadd.f32 %v71, %v155
  %157 = vmatmul.bf16.gmra.mxu0 %v87
  %v158 = vpop.f32.mrf.mxu0
  %v159 = vadd.f32 %v71, %v158
  %v160 = vpop.f32.mrf.mxu0
  %v161 = vadd.f32 %v71, %v160
  %162 = vmatmul.bf16.gmra.mxu0 %v90
  %v163 = vpop.f32.mrf.mxu0
  %v164 = vadd.f32 %v71, %v163
  %v165 = vpop.f32.mrf.mxu0
  %v166 = vadd.f32 %v71, %v165
  %167 = vmatmul.bf16.gmra.mxu0 %v93
  %v168 = vpop.f32.mrf.mxu0
  %v169 = vadd.f32 %v71, %v168
  %v170 = vpop.f32.mrf.mxu0
  %v171 = vadd.f32 %v71, %v170
  %172 = vmatmul.bf16.gmra.mxu0 %v96
  %v173 = vpop.f32.mrf.mxu0
  %v174 = vadd.f32 %v71, %v173
  %v175 = vpop.f32.mrf.mxu0
  %v176 = vadd.f32 %v71, %v175
  %177 = vmatmul.bf16.gmra.mxu0 %v99
  %v178 = vpop.f32.mrf.mxu0
  %v179 = vadd.f32 %v71, %v178
  %v180 = vpop.f32.mrf.mxu0
  %v181 = vadd.f32 %v71, %v180
  %182 = vmatmul.bf16.gmra.mxu0 %v102
  %v183 = vpop.f32.mrf.mxu0
  %v184 = vadd.f32 %v71, %v183
  %v185 = vpop.f32.mrf.mxu0
  %v186 = vadd.f32 %v71, %v185
  %187 = vmatmul.bf16.gmra.mxu0 %v105
  %v188 = vpop.f32.mrf.mxu0
  %v189 = vadd.f32 %v71, %v188
  %v190 = vpop.f32.mrf.mxu0
  %v191 = vadd.f32 %v71, %v190
  %192 = vmatmul.bf16.gmra.mxu0 %v108
  %v193 = vpop.f32.mrf.mxu0
  %v194 = vadd.f32 %v71, %v193
  %v195 = vpop.f32.mrf.mxu0
  %v196 = vadd.f32 %v71, %v195
  %197 = vmatmul.bf16.gmra.mxu0 %v111
  %v198 = vpop.f32.mrf.mxu0
  %v199 = vadd.f32 %v71, %v198
  %v200 = vpop.f32.mrf.mxu0
  %v201 = vadd.f32 %v71, %v200
  %202 = vmatmul.bf16.gmra.mxu0 %v114
  %v203 = vpop.f32.mrf.mxu0
  %v204 = vadd.f32 %v71, %v203
  %v205 = vpop.f32.mrf.mxu0
  %v206 = vadd.f32 %v71, %v205
  %207 = vmatmul.bf16.gmra.mxu0 %v117
  %v208 = vpop.f32.mrf.mxu0
  %v209 = vadd.f32 %v71, %v208
  %v210 = vpop.f32.mrf.mxu0
  %v211 = vadd.f32 %v71, %v210
  %212 = vmatmul.bf16.gmra.mxu0 %v120
  %v213 = vpop.f32.mrf.mxu0
  %v214 = vadd.f32 %v71, %v213
  %v215 = vpop.f32.mrf.mxu0
  %v216 = vadd.f32 %v71, %v215
  %217 = vdwg.mxu0
  %v218 = vmax.f32 %v139, 0.0
  %v219 = vmax.f32 %v141, 0.0
  %v220 = vmax.f32 %v144, 0.0
  %v221 = vmax.f32 %v146, 0.0
  %v222 = vmax.f32 %v149, 0.0
  %v223 = vmax.f32 %v151, 0.0
  %v224 = vmax.f32 %v154, 0.0
  %v225 = vmax.f32 %v156, 0.0
  %v226 = vmax.f32 %v159, 0.0
  %v227 = vmax.f32 %v161, 0.0
  %v228 = vmax.f32 %v164, 0.0
  %v229 = vmax.f32 %v166, 0.0
  %v230 = vmax.f32 %v169, 0.0
  %v231 = vmax.f32 %v171, 0.0
  %v232 = vmax.f32 %v174, 0.0
  %v233 = vmax.f32 %v176, 0.0
  %v234 = vmax.f32 %v179, 0.0
  %v235 = vmax.f32 %v181, 0.0
  %v236 = vmax.f32 %v184, 0.0
  %v237 = vmax.f32 %v186, 0.0
  %v238 = vmax.f32 %v189, 0.0
  %v239 = vmax.f32 %v191, 0.0
  %v240 = vmax.f32 %v194, 0.0
  %v241 = vmax.f32 %v196, 0.0
  %v242 = vmax.f32 %v199, 0.0
  %v243 = vmax.f32 %v201, 0.0
  %v244 = vmax.f32 %v204, 0.0
  %v245 = vmax.f32 %v206, 0.0
  %v246 = vmax.f32 %v209, 0.0
  %v247 = vmax.f32 %v211, 0.0
  %v248 = vmax.f32 %v214, 0.0
  %v249 = vmax.f32 %v216, 0.0
  %vm250 = vcmask 261120
  %251 = vst.msk [vmem:[%s3] sm:$0xff] %vm250, %v218
  %252 = vst.msk [vmem:[%s3 + $0x8] sm:$0xff] %vm250, %v219
  %253 = vst.msk [vmem:[%s3 + $0x10] sm:$0xff] %vm250, %v220
  %254 = vst.msk [vmem:[%s3 + $0x18] sm:$0xff] %vm250, %v221
  %255 = vst.msk [vmem:[%s3 + $0x20] sm:$0xff] %vm250, %v222
  %256 = vst.msk [vmem:[%s3 + $0x28] sm:$0xff] %vm250, %v223
  %257 = vst.msk [vmem:[%s3 + $0x30] sm:$0xff] %vm250, %v224
  %258 = vst.msk [vmem:[%s3 + $0x38] sm:$0xff] %vm250, %v225
  %259 = vst.msk [vmem:[%s3 + $0x40] sm:$0xff] %vm250, %v226
  %260 = vst.msk [vmem:[%s3 + $0x48] sm:$0xff] %vm250, %v227
  %261 = vst.msk [vmem:[%s3 + $0x50] sm:$0xff] %vm250, %v228
  %262 = vst.msk [vmem:[%s3 + $0x58] sm:$0xff] %vm250, %v229
  %263 = vst.msk [vmem:[%s3 + $0x60] sm:$0xff] %vm250, %v230
  %264 = vst.msk [vmem:[%s3 + $0x68] sm:$0xff] %vm250, %v231
  %265 = vst.msk [vmem:[%s3 + $0x70] sm:$0xff] %vm250, %v232
  %266 = vst.msk [vmem:[%s3 + $0x78] sm:$0xff] %vm250, %v233
  %267 = vst.msk [vmem:[%s3 + $0x80] sm:$0xff] %vm250, %v234
  %268 = vst.msk [vmem:[%s3 + $0x88] sm:$0xff] %vm250, %v235
  %269 = vst.msk [vmem:[%s3 + $0x90] sm:$0xff] %vm250, %v236
  %270 = vst.msk [vmem:[%s3 + $0x98] sm:$0xff] %vm250, %v237
  %271 = vst.msk [vmem:[%s3 + $0xa0] sm:$0xff] %vm250, %v238
  %272 = vst.msk [vmem:[%s3 + $0xa8] sm:$0xff] %vm250, %v239
  %273 = vst.msk [vmem:[%s3 + $0xb0] sm:$0xff] %vm250, %v240
  %274 = vst.msk [vmem:[%s3 + $0xb8] sm:$0xff] %vm250, %v241
  %275 = vst.msk [vmem:[%s3 + $0xc0] sm:$0xff] %vm250, %v242
  %276 = vst.msk [vmem:[%s3 + $0xc8] sm:$0xff] %vm250, %v243
  %277 = vst.msk [vmem:[%s3 + $0xd0] sm:$0xff] %vm250, %v244
  %278 = vst.msk [vmem:[%s3 + $0xd8] sm:$0xff] %vm250, %v245
  %279 = vst.msk [vmem:[%s3 + $0xe0] sm:$0xff] %vm250, %v246
  %280 = vst.msk [vmem:[%s3 + $0xe8] sm:$0xff] %vm250, %v247
  %281 = vst.msk [vmem:[%s3 + $0xf0] sm:$0xff] %vm250, %v248
  %282 = vst.msk [vmem:[%s3 + $0xf8] sm:$0xff] %vm250, %v249
  // Predicated region
  $region14: #{monodtr_test_forward.4} parent=0 // pred_check
    _
  $region15: #{monodtr_test_forward.4} parent=0 // pred_check_branch
    %284 = sbr.rel (0) target = $region17
  $region16: #{monodtr_test_forward.4} parent=0 // pred_region
    _
  $region17: #{monodtr_test_forward.4} parent=0 // pred_fallthru
    _
  // Predicated region
  $region18: #{monodtr_test_forward.4} parent=0 // pred_check
    _
  $region19: #{monodtr_test_forward.4} parent=0 // pred_check_branch
    %286 = sbr.rel (0) target = $region21
  $region20: #{monodtr_test_forward.4} parent=0 // pred_region
    _
  $region21: #{monodtr_test_forward.4} parent=0 // pred_fallthru
    _

// kernel: monodtr_test_forward.6
$region0: #{monodtr_test_forward.6}
  #allocation0 [shape = 'u32[]', space=smem, size = 0x4, offset = 0x4, fixed_abs, tag = 'smem constant byte address 0x4 - core index']
  #allocation1 [shape = 'u32[72,128]{1,0:T(1,128)}', space=vmem, size = 0x9000, scoped, tag = 'internal scratch']
  %s0 = inlined_call_operand.vmem [shape: f32[64,288], index: 0, kind: input, shape index: {}]
  %s1 = inlined_call_operand.vmem [shape: f32[288,14], index: 1, kind: input, shape index: {}]
  %s2 = inlined_call_operand.vmem [shape: f32[1,14], index: 2, kind: input, shape index: {}]
  %s3 = inlined_call_operand.vmem [shape: f32[64,14], index: 3, kind: output, shape index: {}]
  %s4 = sld [smem:[#allocation0]]
  $region22: #{monodtr_test_forward.6} parent=0
    _
  %s6 = ssub.s32 1, %s4
  %s7 = scalar_select 0, %s6, %s4
  // Predicated region
  $region2: #{monodtr_test_forward.6} parent=0 // pred_check
    _
  $region3: #{monodtr_test_forward.6} parent=0 // pred_check_branch
    %9 = sbr.rel (0) target = $region5
  $region4: #{monodtr_test_forward.6} parent=0 // pred_region
    _
  $region5: #{monodtr_test_forward.6} parent=0 // pred_fallthru
    _
  // Predicated region
  $region6: #{monodtr_test_forward.6} parent=0 // pred_check
    _
  $region7: #{monodtr_test_forward.6} parent=0 // pred_check_branch
    %11 = sbr.rel (0) target = $region9
  $region8: #{monodtr_test_forward.6} parent=0 // pred_region
    _
  $region9: #{monodtr_test_forward.6} parent=0 // pred_fallthru
    _
  // Predicated region
  $region10: #{monodtr_test_forward.6} parent=0 // pred_check
    _
  $region11: #{monodtr_test_forward.6} parent=0 // pred_check_branch
    %13 = sbr.rel (0) target = $region13
  $region12: #{monodtr_test_forward.6} parent=0 // pred_region
    _
  $region13: #{monodtr_test_forward.6} parent=0 // pred_fallthru
    _
  %v15 = vld [vmem:[%s0] sm:$0xff]
  %v16 = vld [vmem:[%s0 + $0x8] sm:$0xff]
  %v17 = vld [vmem:[%s0 + $0x10] sm:$0xff]
  %v18 = vld [vmem:[%s0 + $0x18] sm:$0xff]
  %v19 = vld [vmem:[%s0 + $0x20] sm:$0xff]
  %v20 = vld [vmem:[%s0 + $0x28] sm:$0xff]
  %v21 = vld [vmem:[%s0 + $0x30] sm:$0xff]
  %v22 = vld [vmem:[%s0 + $0x38] sm:$0xff]
  %v23 = vld [vmem:[%s0 + $0x40] sm:$0xff]
  %v24 = vld [vmem:[%s0 + $0x48] sm:$0xff]
  %v25 = vld [vmem:[%s0 + $0x50] sm:$0xff]
  %v26 = vld [vmem:[%s0 + $0x58] sm:$0xff]
  %v27 = vld [vmem:[%s0 + $0x60] sm:$0xff]
  %v28 = vld [vmem:[%s0 + $0x68] sm:$0xff]
  %v29 = vld [vmem:[%s0 + $0x70] sm:$0xff]
  %v30 = vld [vmem:[%s0 + $0x78] sm:$0xff]
  %v31 = vld [vmem:[%s0 + $0x80] sm:$0xff]
  %v32 = vld [vmem:[%s0 + $0x88] sm:$0xff]
  %v33 = vld [vmem:[%s0 + $0x90] sm:$0xff]
  %v34 = vld [vmem:[%s0 + $0x98] sm:$0xff]
  %v35 = vld [vmem:[%s0 + $0xa0] sm:$0xff]
  %v36 = vld [vmem:[%s0 + $0xa8] sm:$0xff]
  %v37 = vld [vmem:[%s0 + $0xb0] sm:$0xff]
  %v38 = vld [vmem:[%s0 + $0xb8] sm:$0xff]
  %v39 = vld [vmem:[%s1] sm:$0xff]
  %v40 = vld [vmem:[%s1 + $0x8] sm:$0xff]
  %v41 = vld [vmem:[%s1 + $0x10] sm:$0xff]
  %v42 = vld [vmem:[%s1 + $0x18] sm:$0xff]
  %v43 = vld [vmem:[%s1 + $0x20] sm:$0xff]
  %v44 = vld [vmem:[%s1 + $0x28] sm:$0xff]
  %v45 = vld [vmem:[%s1 + $0x30] sm:$0xff]
  %v46 = vld [vmem:[%s1 + $0x38] sm:$0xff]
  %v47 = vld [vmem:[%s1 + $0x40] sm:$0xff]
  %v48 = vld [vmem:[%s1 + $0x48] sm:$0xff]
  %v49 = vld [vmem:[%s1 + $0x50] sm:$0xff]
  %v50 = vld [vmem:[%s1 + $0x58] sm:$0xff]
  %v51 = vld [vmem:[%s1 + $0x60] sm:$0xff]
  %v52 = vld [vmem:[%s1 + $0x68] sm:$0xff]
  %v53 = vld [vmem:[%s1 + $0x70] sm:$0xff]
  %v54 = vld [vmem:[%s1 + $0x78] sm:$0xff]
  %v55 = vld [vmem:[%s1 + $0x80] sm:$0xff]
  %v56 = vld [vmem:[%s1 + $0x88] sm:$0xff]
  %v57 = vld [vmem:[%s1 + $0x90] sm:$0xff]
  %v58 = vld [vmem:[%s1 + $0x98] sm:$0xff]
  %v59 = vld [vmem:[%s1 + $0xa0] sm:$0xff]
  %v60 = vld [vmem:[%s1 + $0xa8] sm:$0xff]
  %v61 = vld [vmem:[%s1 + $0xb0] sm:$0xff]
  %v62 = vld [vmem:[%s1 + $0xb8] sm:$0xff]
  %v63 = vld [vmem:[%s1 + $0xc0] sm:$0xff]
  %v64 = vld [vmem:[%s1 + $0xc8] sm:$0xff]
  %v65 = vld [vmem:[%s1 + $0xd0] sm:$0xff]
  %v66 = vld [vmem:[%s1 + $0xd8] sm:$0xff]
  %v67 = vld [vmem:[%s1 + $0xe0] sm:$0xff]
  %v68 = vld [vmem:[%s1 + $0xe8] sm:$0xff]
  %v69 = vld [vmem:[%s1 + $0xf0] sm:$0xff]
  %v70 = vld [vmem:[%s1 + $0xf8] sm:$0xff]
  %v71 = vld [vmem:[%s1 + $0x100] sm:$0xff]
  %v72 = vld [vmem:[%s1 + $0x108] sm:$0xff]
  %v73 = vld [vmem:[%s1 + $0x110] sm:$0xff]
  %v74 = vld [vmem:[%s1 + $0x118] sm:$0xff]
  %v75 = vpack.c.bf16 %v18, %v15
  %v76 = vpack.c.bf16 %v19, %v16
  %v77 = vpack.c.bf16 %v20, %v17
  %v78 = vpack.c.bf16 %v24, %v21
  %v79 = vpack.c.bf16 %v25, %v22
  %v80 = vpack.c.bf16 %v26, %v23
  %v81 = vpack.c.bf16 %v30, %v27
  %v82 = vpack.c.bf16 %v31, %v28
  %v83 = vpack.c.bf16 %v32, %v29
  %v84 = vpack.c.bf16 %v36, %v33
  %v85 = vpack.c.bf16 %v37, %v34
  %v86 = vpack.c.bf16 %v38, %v35
  %v87 = vpack.c.bf16 %v40, %v39
  %v88 = vpack.c.bf16 %v42, %v41
  %v89 = vpack.c.bf16 %v44, %v43
  %v90 = vpack.c.bf16 %v46, %v45
  %v91 = vpack.c.bf16 %v48, %v47
  %v92 = vpack.c.bf16 %v50, %v49
  %v93 = vpack.c.bf16 %v52, %v51
  %v94 = vpack.c.bf16 %v54, %v53
  %v95 = vpack.c.bf16 %v56, %v55
  %v96 = vpack.c.bf16 %v58, %v57
  %v97 = vpack.c.bf16 %v60, %v59
  %v98 = vpack.c.bf16 %v62, %v61
  %v99 = vpack.c.bf16 %v64, %v63
  %v100 = vpack.c.bf16 %v66, %v65
  %v101 = vpack.c.bf16 %v68, %v67
  %v102 = vpack.c.bf16 %v70, %v69
  %v103 = vpack.c.bf16 %v72, %v71
  %v104 = vpack.c.bf16 %v74, %v73
  %v105 = vld [vmem:[%s2] sm:$0x1]
  %v107 = vperm.slane %v105, 0
  %vm109 = vcmask 261120
  %v111 = vsel %vm109, %v77, 0
  %v114 = vsel %vm109, %v80, 0
  %v117 = vsel %vm109, %v83, 0
  %v120 = vsel %vm109, %v86, 0
  %122 = vmatpush.bf16.msra.mxu0 %v94
  %123 = vmatpush.bf16.msra.mxu0 %v93
  %124 = vmatpush.bf16.msra.mxu0 %v92
  %125 = vmatpush.bf16.msra.mxu0 %v91
  %126 = vmatpush.bf16.msra.mxu0 %v90
  %127 = vmatpush.bf16.msra.mxu0 %v89
  %128 = vmatpush.bf16.msra.mxu0 %v88
  %129 = vmatpush.bf16.msra.mxu0 %v87
  %130 = vmatmul.bf16.gmra.mxu0 %v75
  %v131 = vpop.f32.mrf.mxu0
  %v132 = vadd.f32 %v107, %v131
  %v133 = vpop.f32.mrf.mxu0
  %v134 = vadd.f32 %v107, %v133
  %135 = vmatmul.bf16.gmra.mxu0 %v78
  %v136 = vpop.f32.mrf.mxu0
  %v137 = vadd.f32 %v107, %v136
  %v138 = vpop.f32.mrf.mxu0
  %v139 = vadd.f32 %v107, %v138
  %140 = vmatmul.bf16.gmra.mxu0 %v81
  %v141 = vpop.f32.mrf.mxu0
  %v142 = vadd.f32 %v107, %v141
  %v143 = vpop.f32.mrf.mxu0
  %v144 = vadd.f32 %v107, %v143
  %145 = vmatmul.bf16.gmra.mxu0 %v84
  %v146 = vpop.f32.mrf.mxu0
  %v147 = vadd.f32 %v107, %v146
  %v148 = vpop.f32.mrf.mxu0
  %v149 = vadd.f32 %v107, %v148
  %150 = vdwg.mxu0
  %151 = vmatpush.bf16.msra.mxu0 %v102
  %152 = vmatpush.bf16.msra.mxu0 %v101
  %153 = vmatpush.bf16.msra.mxu0 %v100
  %154 = vmatpush.bf16.msra.mxu0 %v99
  %155 = vmatpush.bf16.msra.mxu0 %v98
  %156 = vmatpush.bf16.msra.mxu0 %v97
  %157 = vmatpush.bf16.msra.mxu0 %v96
  %158 = vmatpush.bf16.msra.mxu0 %v95
  %159 = vmatmul.bf16.gmra.mxu0 %v76
  %v160 = vpop.f32.mrf.mxu0
  %v161 = vadd.f32 %v132, %v160
  %v162 = vpop.f32.mrf.mxu0
  %v163 = vadd.f32 %v134, %v162
  %164 = vmatmul.bf16.gmra.mxu0 %v79
  %v165 = vpop.f32.mrf.mxu0
  %v166 = vadd.f32 %v137, %v165
  %v167 = vpop.f32.mrf.mxu0
  %v168 = vadd.f32 %v139, %v167
  %169 = vmatmul.bf16.gmra.mxu0 %v82
  %v170 = vpop.f32.mrf.mxu0
  %v171 = vadd.f32 %v142, %v170
  %v172 = vpop.f32.mrf.mxu0
  %v173 = vadd.f32 %v144, %v172
  %174 = vmatmul.bf16.gmra.mxu0 %v85
  %v175 = vpop.f32.mrf.mxu0
  %v176 = vadd.f32 %v147, %v175
  %v177 = vpop.f32.mrf.mxu0
  %v178 = vadd.f32 %v149, %v177
  %179 = vdwg.mxu0
  %180 = vmatpush.bf16.msra.mxu0 0
  %181 = vmatpush.bf16.msra.mxu0 0
  %182 = vmatpush.bf16.msra.mxu0 0
  %183 = vmatpush.bf16.msra.mxu0 0
  %184 = vmatpush.bf16.msra.mxu0 0
  %185 = vmatpush.bf16.msra.mxu0 0
  %186 = vmatpush.bf16.msra.mxu0 %v104
  %187 = vmatpush.bf16.msra.mxu0 %v103
  %188 = vmatmul.bf16.gmra.mxu0 %v111
  %v189 = vpop.f32.mrf.mxu0
  %v190 = vadd.f32 %v161, %v189
  %v191 = vpop.f32.mrf.mxu0
  %v192 = vadd.f32 %v163, %v191
  %193 = vmatmul.bf16.gmra.mxu0 %v114
  %v194 = vpop.f32.mrf.mxu0
  %v195 = vadd.f32 %v166, %v194
  %v196 = vpop.f32.mrf.mxu0
  %v197 = vadd.f32 %v168, %v196
  %198 = vmatmul.bf16.gmra.mxu0 %v117
  %v199 = vpop.f32.mrf.mxu0
  %v200 = vadd.f32 %v171, %v199
  %v201 = vpop.f32.mrf.mxu0
  %v202 = vadd.f32 %v173, %v201
  %203 = vmatmul.bf16.gmra.mxu0 %v120
  %v204 = vpop.f32.mrf.mxu0
  %v205 = vadd.f32 %v176, %v204
  %v206 = vpop.f32.mrf.mxu0
  %v207 = vadd.f32 %v178, %v206
  %208 = vdwg.mxu0
  %vm209 = vcmask 113664
  %210 = vst.msk [vmem:[%s3] sm:$0xff] %vm209, %v190
  %211 = vst.msk [vmem:[%s3 + $0x8] sm:$0xff] %vm209, %v192
  %212 = vst.msk [vmem:[%s3 + $0x10] sm:$0xff] %vm209, %v195
  %213 = vst.msk [vmem:[%s3 + $0x18] sm:$0xff] %vm209, %v197
  %214 = vst.msk [vmem:[%s3 + $0x20] sm:$0xff] %vm209, %v200
  %215 = vst.msk [vmem:[%s3 + $0x28] sm:$0xff] %vm209, %v202
  %216 = vst.msk [vmem:[%s3 + $0x30] sm:$0xff] %vm209, %v205
  %217 = vst.msk [vmem:[%s3 + $0x38] sm:$0xff] %vm209, %v207
  // Predicated region
  $region14: #{monodtr_test_forward.6} parent=0 // pred_check
    _
  $region15: #{monodtr_test_forward.6} parent=0 // pred_check_branch
    %219 = sbr.rel (0) target = $region17
  $region16: #{monodtr_test_forward.6} parent=0 // pred_region
    _
  $region17: #{monodtr_test_forward.6} parent=0 // pred_fallthru
    _
  // Predicated region
  $region18: #{monodtr_test_forward.6} parent=0 // pred_check
    _
  $region19: #{monodtr_test_forward.6} parent=0 // pred_check_branch
    %221 = sbr.rel (0) target = $region21
  $region20: #{monodtr_test_forward.6} parent=0 // pred_region
    _
  $region21: #{monodtr_test_forward.6} parent=0 // pred_fallthru
    _

// kernel: monodtr_test_forward.5
$region0: #{monodtr_test_forward.5}
  #allocation0 [shape = 'u32[]', space=smem, size = 0x4, offset = 0x4, fixed_abs, tag = 'smem constant byte address 0x4 - core index']
  #allocation1 [shape = 'u32[72,128]{1,0:T(1,128)}', space=vmem, size = 0x9000, scoped, tag = 'internal scratch']
  %s0 = inlined_call_operand.vmem [shape: f32[64,288], index: 0, kind: input, shape index: {}]
  %s1 = inlined_call_operand.vmem [shape: f32[288,32], index: 1, kind: input, shape index: {}]
  %s2 = inlined_call_operand.vmem [shape: f32[1,32], index: 2, kind: input, shape index: {}, may-alias: {2,12}]
  %s3 = inlined_call_operand.vmem [shape: f32[32,96], index: 3, kind: input, shape index: {}]
  %s4 = inlined_call_operand.vmem [shape: f32[1,96], index: 4, kind: input, shape index: {}]
  %s5 = inlined_call_operand.vmem [shape: f32[96,32], index: 5, kind: input, shape index: {}]
  %s6 = inlined_call_operand.vmem [shape: f32[1,32], index: 6, kind: input, shape index: {}]
  %s7 = inlined_call_operand.vmem [shape: f32[32,96], index: 7, kind: input, shape index: {}]
  %s8 = inlined_call_operand.vmem [shape: f32[32,32], index: 8, kind: input, shape index: {}]
  %s9 = inlined_call_operand.vmem [shape: f32[32,64], index: 9, kind: input, shape index: {}]
  %s10 = inlined_call_operand.vmem [shape: f32[1,64], index: 10, kind: input, shape index: {}]
  %s11 = inlined_call_operand.vmem [shape: f32[64,32], index: 11, kind: input, shape index: {}]
  %s12 = inlined_call_operand.vmem [shape: f32[1,32], index: 12, kind: input, shape index: {}, may-alias: {2,12}]
  %s13 = inlined_call_operand.vmem [shape: f32[64,32], index: 13, kind: output, shape index: {}]
  %s14 = sld [smem:[#allocation0]]
  $region62: #{monodtr_test_forward.5} parent=0
    _
  %s16 = ssub.s32 1, %s14
  %s17 = scalar_select 0, %s16, %s14
  // Predicated region
  $region2: #{monodtr_test_forward.5} parent=0 // pred_check
    _
  $region3: #{monodtr_test_forward.5} parent=0 // pred_check_branch
    %19 = sbr.rel (0) target = $region5
  $region4: #{monodtr_test_forward.5} parent=0 // pred_region
    _
  $region5: #{monodtr_test_forward.5} parent=0 // pred_fallthru
    _
  // Predicated region
  $region6: #{monodtr_test_forward.5} parent=0 // pred_check
    _
  $region7: #{monodtr_test_forward.5} parent=0 // pred_check_branch
    %21 = sbr.rel (0) target = $region9
  $region8: #{monodtr_test_forward.5} parent=0 // pred_region
    _
  $region9: #{monodtr_test_forward.5} parent=0 // pred_fallthru
    _
  // Predicated region
  $region10: #{monodtr_test_forward.5} parent=0 // pred_check
    _
  $region11: #{monodtr_test_forward.5} parent=0 // pred_check_branch
    %23 = sbr.rel (0) target = $region13
  $region12: #{monodtr_test_forward.5} parent=0 // pred_region
    _
  $region13: #{monodtr_test_forward.5} parent=0 // pred_fallthru
    _
  // Predicated region
  $region14: #{monodtr_test_forward.5} parent=0 // pred_check
    _
  $region15: #{monodtr_test_forward.5} parent=0 // pred_check_branch
    %25 = sbr.rel (0) target = $region17
  $region16: #{monodtr_test_forward.5} parent=0 // pred_region
    _
  $region17: #{monodtr_test_forward.5} parent=0 // pred_fallthru
    _
  // Predicated region
  $region18: #{monodtr_test_forward.5} parent=0 // pred_check
    _
  $region19: #{monodtr_test_forward.5} parent=0 // pred_check_branch
    %27 = sbr.rel (0) target = $region21
  $region20: #{monodtr_test_forward.5} parent=0 // pred_region
    _
  $region21: #{monodtr_test_forward.5} parent=0 // pred_fallthru
    _
  // Predicated region
  $region22: #{monodtr_test_forward.5} parent=0 // pred_check
    _
  $region23: #{monodtr_test_forward.5} parent=0 // pred_check_branch
    %29 = sbr.rel (0) target = $region25
  $region24: #{monodtr_test_forward.5} parent=0 // pred_region
    _
  $region25: #{monodtr_test_forward.5} parent=0 // pred_fallthru
    _
  // Predicated region
  $region26: #{monodtr_test_forward.5} parent=0 // pred_check
    _
  $region27: #{monodtr_test_forward.5} parent=0 // pred_check_branch
    %31 = sbr.rel (0) target = $region29
  $region28: #{monodtr_test_forward.5} parent=0 // pred_region
    _
  $region29: #{monodtr_test_forward.5} parent=0 // pred_fallthru
    _
  // Predicated region
  $region30: #{monodtr_test_forward.5} parent=0 // pred_check
    _
  $region31: #{monodtr_test_forward.5} parent=0 // pred_check_branch
    %33 = sbr.rel (0) target = $region33
  $region32: #{monodtr_test_forward.5} parent=0 // pred_region
    _
  $region33: #{monodtr_test_forward.5} parent=0 // pred_fallthru
    _
  // Predicated region
  $region34: #{monodtr_test_forward.5} parent=0 // pred_check
    _
  $region35: #{monodtr_test_forward.5} parent=0 // pred_check_branch
    %35 = sbr.rel (0) target = $region37
  $region36: #{monodtr_test_forward.5} parent=0 // pred_region
    _
  $region37: #{monodtr_test_forward.5} parent=0 // pred_fallthru
    _
  // Predicated region
  $region38: #{monodtr_test_forward.5} parent=0 // pred_check
    _
  $region39: #{monodtr_test_forward.5} parent=0 // pred_check_branch
    %37 = sbr.rel (0) target = $region41
  $region40: #{monodtr_test_forward.5} parent=0 // pred_region
    _
  $region41: #{monodtr_test_forward.5} parent=0 // pred_fallthru
    _
  // Predicated region
  $region42: #{monodtr_test_forward.5} parent=0 // pred_check
    _
  $region43: #{monodtr_test_forward.5} parent=0 // pred_check_branch
    %39 = sbr.rel (0) target = $region45
  $region44: #{monodtr_test_forward.5} parent=0 // pred_region
    _
  $region45: #{monodtr_test_forward.5} parent=0 // pred_fallthru
    _
  // Predicated region
  $region46: #{monodtr_test_forward.5} parent=0 // pred_check
    _
  $region47: #{monodtr_test_forward.5} parent=0 // pred_check_branch
    %41 = sbr.rel (0) target = $region49
  $region48: #{monodtr_test_forward.5} parent=0 // pred_region
    _
  $region49: #{monodtr_test_forward.5} parent=0 // pred_fallthru
    _
  // Predicated region
  $region50: #{monodtr_test_forward.5} parent=0 // pred_check
    _
  $region51: #{monodtr_test_forward.5} parent=0 // pred_check_branch
    %43 = sbr.rel (0) target = $region53
  $region52: #{monodtr_test_forward.5} parent=0 // pred_region
    _
  $region53: #{monodtr_test_forward.5} parent=0 // pred_fallthru
    _
  %v45 = vld [vmem:[%s0] sm:$0xff]
  %v46 = vld [vmem:[%s0 + $0x8] sm:$0xff]
  %v47 = vld [vmem:[%s0 + $0x10] sm:$0xff]
  %v48 = vld [vmem:[%s0 + $0x18] sm:$0xff]
  %v49 = vld [vmem:[%s0 + $0x20] sm:$0xff]
  %v50 = vld [vmem:[%s0 + $0x28] sm:$0xff]
  %v51 = vld [vmem:[%s0 + $0x30] sm:$0xff]
  %v52 = vld [vmem:[%s0 + $0x38] sm:$0xff]
  %v53 = vld [vmem:[%s0 + $0x40] sm:$0xff]
  %v54 = vld [vmem:[%s0 + $0x48] sm:$0xff]
  %v55 = vld [vmem:[%s0 + $0x50] sm:$0xff]
  %v56 = vld [vmem:[%s0 + $0x58] sm:$0xff]
  %v57 = vld [vmem:[%s0 + $0x60] sm:$0xff]
  %v58 = vld [vmem:[%s0 + $0x68] sm:$0xff]
  %v59 = vld [vmem:[%s0 + $0x70] sm:$0xff]
  %v60 = vld [vmem:[%s0 + $0x78] sm:$0xff]
  %v61 = vld [vmem:[%s0 + $0x80] sm:$0xff]
  %v62 = vld [vmem:[%s0 + $0x88] sm:$0xff]
  %v63 = vld [vmem:[%s0 + $0x90] sm:$0xff]
  %v64 = vld [vmem:[%s0 + $0x98] sm:$0xff]
  %v65 = vld [vmem:[%s0 + $0xa0] sm:$0xff]
  %v66 = vld [vmem:[%s0 + $0xa8] sm:$0xff]
  %v67 = vld [vmem:[%s0 + $0xb0] sm:$0xff]
  %v68 = vld [vmem:[%s0 + $0xb8] sm:$0xff]
  %v69 = vld [vmem:[%s1] sm:$0xff]
  %v70 = vld [vmem:[%s1 + $0x8] sm:$0xff]
  %v71 = vld [vmem:[%s1 + $0x10] sm:$0xff]
  %v72 = vld [vmem:[%s1 + $0x18] sm:$0xff]
  %v73 = vld [vmem:[%s1 + $0x20] sm:$0xff]
  %v74 = vld [vmem:[%s1 + $0x28] sm:$0xff]
  %v75 = vld [vmem:[%s1 + $0x30] sm:$0xff]
  %v76 = vld [vmem:[%s1 + $0x38] sm:$0xff]
  %v77 = vld [vmem:[%s1 + $0x40] sm:$0xff]
  %v78 = vld [vmem:[%s1 + $0x48] sm:$0xff]
  %v79 = vld [vmem:[%s1 + $0x50] sm:$0xff]
  %v80 = vld [vmem:[%s1 + $0x58] sm:$0xff]
  %v81 = vld [vmem:[%s1 + $0x60] sm:$0xff]
  %v82 = vld [vmem:[%s1 + $0x68] sm:$0xff]
  %v83 = vld [vmem:[%s1 + $0x70] sm:$0xff]
  %v84 = vld [vmem:[%s1 + $0x78] sm:$0xff]
  %v85 = vld [vmem:[%s1 + $0x80] sm:$0xff]
  %v86 = vld [vmem:[%s1 + $0x88] sm:$0xff]
  %v87 = vld [vmem:[%s1 + $0x90] sm:$0xff]
  %v88 = vld [vmem:[%s1 + $0x98] sm:$0xff]
  %v89 = vld [vmem:[%s1 + $0xa0] sm:$0xff]
  %v90 = vld [vmem:[%s1 + $0xa8] sm:$0xff]
  %v91 = vld [vmem:[%s1 + $0xb0] sm:$0xff]
  %v92 = vld [vmem:[%s1 + $0xb8] sm:$0xff]
  %v93 = vld [vmem:[%s1 + $0xc0] sm:$0xff]
  %v94 = vld [vmem:[%s1 + $0xc8] sm:$0xff]
  %v95 = vld [vmem:[%s1 + $0xd0] sm:$0xff]
  %v96 = vld [vmem:[%s1 + $0xd8] sm:$0xff]
  %v97 = vld [vmem:[%s1 + $0xe0] sm:$0xff]
  %v98 = vld [vmem:[%s1 + $0xe8] sm:$0xff]
  %v99 = vld [vmem:[%s1 + $0xf0] sm:$0xff]
  %v100 = vld [vmem:[%s1 + $0xf8] sm:$0xff]
  %v101 = vld [vmem:[%s1 + $0x100] sm:$0xff]
  %v102 = vld [vmem:[%s1 + $0x108] sm:$0xff]
  %v103 = vld [vmem:[%s1 + $0x110] sm:$0xff]
  %v104 = vld [vmem:[%s1 + $0x118] sm:$0xff]
  %v105 = vpack.c.bf16 %v48, %v45
  %v106 = vpack.c.bf16 %v49, %v46
  %v107 = vpack.c.bf16 %v50, %v47
  %v108 = vpack.c.bf16 %v54, %v51
  %v109 = vpack.c.bf16 %v55, %v52
  %v110 = vpack.c.bf16 %v56, %v53
  %v111 = vpack.c.bf16 %v60, %v57
  %v112 = vpack.c.bf16 %v61, %v58
  %v113 = vpack.c.bf16 %v62, %v59
  %v114 = vpack.c.bf16 %v66, %v63
  %v115 = vpack.c.bf16 %v67, %v64
  %v116 = vpack.c.bf16 %v68, %v65
  %v117 = vpack.c.bf16 %v70, %v69
  %v118 = vpack.c.bf16 %v72, %v71
  %v119 = vpack.c.bf16 %v74, %v73
  %v120 = vpack.c.bf16 %v76, %v75
  %v121 = vpack.c.bf16 %v78, %v77
  %v122 = vpack.c.bf16 %v80, %v79
  %v123 = vpack.c.bf16 %v82, %v81
  %v124 = vpack.c.bf16 %v84, %v83
  %v125 = vpack.c.bf16 %v86, %v85
  %v126 = vpack.c.bf16 %v88, %v87
  %v127 = vpack.c.bf16 %v90, %v89
  %v128 = vpack.c.bf16 %v92, %v91
  %v129 = vpack.c.bf16 %v94, %v93
  %v130 = vpack.c.bf16 %v96, %v95
  %v131 = vpack.c.bf16 %v98, %v97
  %v132 = vpack.c.bf16 %v100, %v99
  %v133 = vpack.c.bf16 %v102, %v101
  %v134 = vpack.c.bf16 %v104, %v103
  %v135 = vld [vmem:[%s2] sm:$0x1]
  %v137 = vperm.slane %v135, 0
  %vm139 = vcmask 261120
  %v141 = vsel %vm139, %v107, 0
  %v144 = vsel %vm139, %v110, 0
  %v147 = vsel %vm139, %v113, 0
  %v150 = vsel %vm139, %v116, 0
  %152 = vmatpush.bf16.msra.mxu0 %v124
  %153 = vmatpush.bf16.msra.mxu0 %v123
  %154 = vmatpush.bf16.msra.mxu0 %v122
  %155 = vmatpush.bf16.msra.mxu0 %v121
  %156 = vmatpush.bf16.msra.mxu0 %v120
  %157 = vmatpush.bf16.msra.mxu0 %v119
  %158 = vmatpush.bf16.msra.mxu0 %v118
  %159 = vmatpush.bf16.msra.mxu0 %v117
  %160 = vmatmul.bf16.gmra.mxu0 %v105
  %v161 = vpop.f32.mrf.mxu0
  %v162 = vadd.f32 %v137, %v161
  %v163 = vpop.f32.mrf.mxu0
  %v164 = vadd.f32 %v137, %v163
  %165 = vmatmul.bf16.gmra.mxu0 %v108
  %v166 = vpop.f32.mrf.mxu0
  %v167 = vadd.f32 %v137, %v166
  %v168 = vpop.f32.mrf.mxu0
  %v169 = vadd.f32 %v137, %v168
  %170 = vmatmul.bf16.gmra.mxu0 %v111
  %v171 = vpop.f32.mrf.mxu0
  %v172 = vadd.f32 %v137, %v171
  %v173 = vpop.f32.mrf.mxu0
  %v174 = vadd.f32 %v137, %v173
  %175 = vmatmul.bf16.gmra.mxu0 %v114
  %v176 = vpop.f32.mrf.mxu0
  %v177 = vadd.f32 %v137, %v176
  %v178 = vpop.f32.mrf.mxu0
  %v179 = vadd.f32 %v137, %v178
  %180 = vdwg.mxu0
  %181 = vmatpush.bf16.msra.mxu0 %v132
  %182 = vmatpush.bf16.msra.mxu0 %v131
  %183 = vmatpush.bf16.msra.mxu0 %v130
  %184 = vmatpush.bf16.msra.mxu0 %v129
  %185 = vmatpush.bf16.msra.mxu0 %v128
  %186 = vmatpush.bf16.msra.mxu0 %v127
  %187 = vmatpush.bf16.msra.mxu0 %v126
  %188 = vmatpush.bf16.msra.mxu0 %v125
  %189 = vmatmul.bf16.gmra.mxu0 %v106
  %v190 = vpop.f32.mrf.mxu0
  %v191 = vadd.f32 %v162, %v190
  %v192 = vpop.f32.mrf.mxu0
  %v193 = vadd.f32 %v164, %v192
  %194 = vmatmul.bf16.gmra.mxu0 %v109
  %v195 = vpop.f32.mrf.mxu0
  %v196 = vadd.f32 %v167, %v195
  %v197 = vpop.f32.mrf.mxu0
  %v198 = vadd.f32 %v169, %v197
  %199 = vmatmul.bf16.gmra.mxu0 %v112
  %v200 = vpop.f32.mrf.mxu0
  %v201 = vadd.f32 %v172, %v200
  %v202 = vpop.f32.mrf.mxu0
  %v203 = vadd.f32 %v174, %v202
  %204 = vmatmul.bf16.gmra.mxu0 %v115
  %v205 = vpop.f32.mrf.mxu0
  %v206 = vadd.f32 %v177, %v205
  %v207 = vpop.f32.mrf.mxu0
  %v208 = vadd.f32 %v179, %v207
  %209 = vdwg.mxu0
  %210 = vmatpush.bf16.msra.mxu0 0
  %211 = vmatpush.bf16.msra.mxu0 0
  %212 = vmatpush.bf16.msra.mxu0 0
  %213 = vmatpush.bf16.msra.mxu0 0
  %214 = vmatpush.bf16.msra.mxu0 0
  %215 = vmatpush.bf16.msra.mxu0 0
  %216 = vmatpush.bf16.msra.mxu0 %v134
  %217 = vmatpush.bf16.msra.mxu0 %v133
  %218 = vmatmul.bf16.gmra.mxu0 %v141
  %v219 = vpop.f32.mrf.mxu0
  %v220 = vadd.f32 %v191, %v219
  %v221 = vpop.f32.mrf.mxu0
  %v222 = vadd.f32 %v193, %v221
  %223 = vmatmul.bf16.gmra.mxu0 %v144
  %v224 = vpop.f32.mrf.mxu0
  %v225 = vadd.f32 %v196, %v224
  %v226 = vpop.f32.mrf.mxu0
  %v227 = vadd.f32 %v198, %v226
  %228 = vmatmul.bf16.gmra.mxu0 %v147
  %v229 = vpop.f32.mrf.mxu0
  %v230 = vadd.f32 %v201, %v229
  %v231 = vpop.f32.mrf.mxu0
  %v232 = vadd.f32 %v203, %v231
  %233 = vmatmul.bf16.gmra.mxu0 %v150
  %v234 = vpop.f32.mrf.mxu0
  %v235 = vadd.f32 %v206, %v234
  %v236 = vpop.f32.mrf.mxu0
  %v237 = vadd.f32 %v208, %v236
  %238 = vdwg.mxu0
  %v239 = vmax.f32 %v220, 0.0
  %v240 = vmax.f32 %v222, 0.0
  %v241 = vmax.f32 %v225, 0.0
  %v242 = vmax.f32 %v227, 0.0
  %v243 = vmax.f32 %v230, 0.0
  %v244 = vmax.f32 %v232, 0.0
  %v245 = vmax.f32 %v235, 0.0
  %v246 = vmax.f32 %v237, 0.0
  %v247 = vld [vmem:[%s3] sm:$0xff]
  %v248 = vld [vmem:[%s3 + $0x8] sm:$0xff]
  %v249 = vld [vmem:[%s3 + $0x10] sm:$0xff]
  %v250 = vld [vmem:[%s3 + $0x18] sm:$0xff]
  %v251 = vpack.c.bf16 %v240, %v239
  %v252 = vpack.c.bf16 %v242, %v241
  %v253 = vpack.c.bf16 %v244, %v243
  %v254 = vpack.c.bf16 %v246, %v245
  %v255 = vpack.c.bf16 %v248, %v247
  %v256 = vpack.c.bf16 %v250, %v249
  %v257 = vld [vmem:[%s4] sm:$0x1]
  %v259 = vperm.slane %v257, 0
  %v262 = vsel %vm139, %v251, 0
  %v265 = vsel %vm139, %v252, 0
  %v268 = vsel %vm139, %v253, 0
  %v271 = vsel %vm139, %v254, 0
  %273 = vmatpush.bf16.msra.mxu0 0
  %274 = vmatpush.bf16.msra.mxu0 0
  %275 = vmatpush.bf16.msra.mxu0 0
  %276 = vmatpush.bf16.msra.mxu0 0
  %277 = vmatpush.bf16.msra.mxu0 0
  %278 = vmatpush.bf16.msra.mxu0 0
  %279 = vmatpush.bf16.msra.mxu0 %v256
  %280 = vmatpush.bf16.msra.mxu0 %v255
  %281 = vmatmul.bf16.gmra.mxu0 %v262
  %v282 = vpop.f32.mrf.mxu0
  %v283 = vadd.f32 %v259, %v282
  %v284 = vpop.f32.mrf.mxu0
  %v285 = vadd.f32 %v259, %v284
  %286 = vmatmul.bf16.gmra.mxu0 %v265
  %v287 = vpop.f32.mrf.mxu0
  %v288 = vadd.f32 %v259, %v287
  %v289 = vpop.f32.mrf.mxu0
  %v290 = vadd.f32 %v259, %v289
  %291 = vmatmul.bf16.gmra.mxu0 %v268
  %v292 = vpop.f32.mrf.mxu0
  %v293 = vadd.f32 %v259, %v292
  %v294 = vpop.f32.mrf.mxu0
  %v295 = vadd.f32 %v259, %v294
  %296 = vmatmul.bf16.gmra.mxu0 %v271
  %v297 = vpop.f32.mrf.mxu0
  %v298 = vadd.f32 %v259, %v297
  %v299 = vpop.f32.mrf.mxu0
  %v300 = vadd.f32 %v259, %v299
  %301 = vdwg.mxu0
  %vm302 = vcmask 785408
  %v303 = vsel %vm302, %v283, -inf
  %304 = vmax.xlane.f32.xlu0 %v303
  %v305 = vpop.xlane.xlu0 %304
  %v306 = vsel %vm302, %v285, -inf
  %307 = vmax.xlane.f32.xlu0 %v306
  %v308 = vpop.xlane.xlu0 %307
  %v309 = vsel %vm302, %v288, -inf
  %310 = vmax.xlane.f32.xlu0 %v309
  %v311 = vpop.xlane.xlu0 %310
  %v312 = vsel %vm302, %v290, -inf
  %313 = vmax.xlane.f32.xlu0 %v312
  %v314 = vpop.xlane.xlu0 %313
  %v315 = vsel %vm302, %v293, -inf
  %316 = vmax.xlane.f32.xlu0 %v315
  %v317 = vpop.xlane.xlu0 %316
  %v318 = vsel %vm302, %v295, -inf
  %319 = vmax.xlane.f32.xlu0 %v318
  %v320 = vpop.xlane.xlu0 %319
  %v321 = vsel %vm302, %v298, -inf
  %322 = vmax.xlane.f32.xlu0 %v321
  %v323 = vpop.xlane.xlu0 %322
  %v324 = vsel %vm302, %v300, -inf
  %325 = vmax.xlane.f32.xlu0 %v324
  %v326 = vpop.xlane.xlu0 %325
  %v327 = vsub.f32 %v283, %v305
  %v328 = vsub.f32 %v285, %v308
  %v329 = vsub.f32 %v288, %v311
  %v330 = vsub.f32 %v290, %v314
  %v331 = vsub.f32 %v293, %v317
  %v332 = vsub.f32 %v295, %v320
  %v333 = vsub.f32 %v298, %v323
  %v334 = vsub.f32 %v300, %v326
  %v335 = vmul.f32 %v327, 1.442695
  %v336 = vpow.pop %v335
  %v337 = vmul.f32 %v328, 1.442695
  %v338 = vpow.pop %v337
  %v339 = vmul.f32 %v329, 1.442695
  %v340 = vpow.pop %v339
  %v341 = vmul.f32 %v330, 1.442695
  %v342 = vpow.pop %v341
  %v343 = vmul.f32 %v331, 1.442695
  %v344 = vpow.pop %v343
  %v345 = vmul.f32 %v332, 1.442695
  %v346 = vpow.pop %v345
  %v347 = vmul.f32 %v333, 1.442695
  %v348 = vpow.pop %v347
  %v349 = vmul.f32 %v334, 1.442695
  %v350 = vpow.pop %v349
  %v351 = vsel %vm302, %v336, 0.0
  %352 = vadd.xlane.f32.xlu0 %v351
  %v353 = vpop.xlane.xlu0 %352
  %v354 = vsel %vm302, %v338, 0.0
  %355 = vadd.xlane.f32.xlu0 %v354
  %v356 = vpop.xlane.xlu0 %355
  %v357 = vsel %vm302, %v340, 0.0
  %358 = vadd.xlane.f32.xlu0 %v357
  %v359 = vpop.xlane.xlu0 %358
  %v360 = vsel %vm302, %v342, 0.0
  %361 = vadd.xlane.f32.xlu0 %v360
  %v362 = vpop.xlane.xlu0 %361
  %v363 = vsel %vm302, %v344, 0.0
  %364 = vadd.xlane.f32.xlu0 %v363
  %v365 = vpop.xlane.xlu0 %364
  %v366 = vsel %vm302, %v346, 0.0
  %367 = vadd.xlane.f32.xlu0 %v366
  %v368 = vpop.xlane.xlu0 %367
  %v369 = vsel %vm302, %v348, 0.0
  %370 = vadd.xlane.f32.xlu0 %v369
  %v371 = vpop.xlane.xlu0 %370
  %v372 = vsel %vm302, %v350, 0.0
  %373 = vadd.xlane.f32.xlu0 %v372
  %v374 = vpop.xlane.xlu0 %373
  %v375 = vrcp.pop %v353
  %v376 = vrcp.pop %v356
  %v377 = vrcp.pop %v359
  %v378 = vrcp.pop %v362
  %v379 = vrcp.pop %v365
  %v380 = vrcp.pop %v368
  %v381 = vrcp.pop %v371
  %v382 = vrcp.pop %v374
  %v383 = vmul.f32 %v336, %v375
  %v384 = vmul.f32 %v338, %v376
  %v385 = vmul.f32 %v340, %v377
  %v386 = vmul.f32 %v342, %v378
  %v387 = vmul.f32 %v344, %v379
  %v388 = vmul.f32 %v346, %v380
  %v389 = vmul.f32 %v348, %v381
  %v390 = vmul.f32 %v350, %v382
  %v391 = vld [vmem:[%s5] sm:$0xff]
  %v392 = vld [vmem:[%s5 + $0x8] sm:$0xff]
  %v393 = vld [vmem:[%s5 + $0x10] sm:$0xff]
  %v394 = vld [vmem:[%s5 + $0x18] sm:$0xff]
  %v395 = vld [vmem:[%s5 + $0x20] sm:$0xff]
  %v396 = vld [vmem:[%s5 + $0x28] sm:$0xff]
  %v397 = vld [vmem:[%s5 + $0x30] sm:$0xff]
  %v398 = vld [vmem:[%s5 + $0x38] sm:$0xff]
  %v399 = vld [vmem:[%s5 + $0x40] sm:$0xff]
  %v400 = vld [vmem:[%s5 + $0x48] sm:$0xff]
  %v401 = vld [vmem:[%s5 + $0x50] sm:$0xff]
  %v402 = vld [vmem:[%s5 + $0x58] sm:$0xff]
  %v403 = vpack.c.bf16 %v384, %v383
  %v404 = vpack.c.bf16 %v386, %v385
  %v405 = vpack.c.bf16 %v388, %v387
  %v406 = vpack.c.bf16 %v390, %v389
  %v407 = vpack.c.bf16 %v392, %v391
  %v408 = vpack.c.bf16 %v394, %v393
  %v409 = vpack.c.bf16 %v396, %v395
  %v410 = vpack.c.bf16 %v398, %v397
  %v411 = vpack.c.bf16 %v400, %v399
  %v412 = vpack.c.bf16 %v402, %v401
  %v414 = vsel %vm302, %v403, 0
  %v417 = vsel %vm302, %v404, 0
  %v420 = vsel %vm302, %v405, 0
  %v423 = vsel %vm302, %v406, 0
  %425 = vmatpush.bf16.msra.mxu0 0
  %426 = vmatpush.bf16.msra.mxu0 0
  %427 = vmatpush.bf16.msra.mxu0 %v412
  %428 = vmatpush.bf16.msra.mxu0 %v411
  %429 = vmatpush.bf16.msra.mxu0 %v410
  %430 = vmatpush.bf16.msra.mxu0 %v409
  %431 = vmatpush.bf16.msra.mxu0 %v408
  %432 = vmatpush.bf16.msra.mxu0 %v407
  %433 = vmatmul.bf16.gmra.mxu0 %v414
  %v434 = vpop.f32.mrf.mxu0
  %v435 = vadd.f32 0.0, %v434
  %v436 = vpop.f32.mrf.mxu0
  %v437 = vadd.f32 0.0, %v436
  %438 = vmatmul.bf16.gmra.mxu0 %v417
  %v439 = vpop.f32.mrf.mxu0
  %v440 = vadd.f32 0.0, %v439
  %v441 = vpop.f32.mrf.mxu0
  %v442 = vadd.f32 0.0, %v441
  %443 = vmatmul.bf16.gmra.mxu0 %v420
  %v444 = vpop.f32.mrf.mxu0
  %v445 = vadd.f32 0.0, %v444
  %v446 = vpop.f32.mrf.mxu0
  %v447 = vadd.f32 0.0, %v446
  %448 = vmatmul.bf16.gmra.mxu0 %v423
  %v449 = vpop.f32.mrf.mxu0
  %v450 = vadd.f32 0.0, %v449
  %v451 = vpop.f32.mrf.mxu0
  %v452 = vadd.f32 0.0, %v451
  %453 = vdwg.mxu0
  %v454 = vadd.f32 %v239, %v435
  %v455 = vadd.f32 %v240, %v437
  %v456 = vadd.f32 %v241, %v440
  %v457 = vadd.f32 %v242, %v442
  %v458 = vadd.f32 %v243, %v445
  %v459 = vadd.f32 %v244, %v447
  %v460 = vadd.f32 %v245, %v450
  %v461 = vadd.f32 %v246, %v452
  %v462 = vld [vmem:[%s6] sm:$0x1]
  %v464 = vperm.slane %v462, 0
  %v466 = vadd.f32 %v454, %v464
  %v467 = vadd.f32 %v455, %v464
  %v468 = vadd.f32 %v456, %v464
  %v469 = vadd.f32 %v457, %v464
  %v470 = vadd.f32 %v458, %v464
  %v471 = vadd.f32 %v459, %v464
  %v472 = vadd.f32 %v460, %v464
  %v473 = vadd.f32 %v461, %v464
  %v474 = vld [vmem:[%s7] sm:$0xff]
  %v475 = vld [vmem:[%s7 + $0x8] sm:$0xff]
  %v476 = vld [vmem:[%s7 + $0x10] sm:$0xff]
  %v477 = vld [vmem:[%s7 + $0x18] sm:$0xff]
  %v478 = vpack.c.bf16 %v467, %v466
  %v479 = vpack.c.bf16 %v469, %v468
  %v480 = vpack.c.bf16 %v471, %v470
  %v481 = vpack.c.bf16 %v473, %v472
  %v482 = vpack.c.bf16 %v475, %v474
  %v483 = vpack.c.bf16 %v477, %v476
  %v485 = vsel %vm139, %v478, 0
  %v488 = vsel %vm139, %v479, 0
  %v491 = vsel %vm139, %v480, 0
  %v494 = vsel %vm139, %v481, 0
  %496 = vmatpush.bf16.msra.mxu0 0
  %497 = vmatpush.bf16.msra.mxu0 0
  %498 = vmatpush.bf16.msra.mxu0 0
  %499 = vmatpush.bf16.msra.mxu0 0
  %500 = vmatpush.bf16.msra.mxu0 0
  %501 = vmatpush.bf16.msra.mxu0 0
  %502 = vmatpush.bf16.msra.mxu0 %v483
  %503 = vmatpush.bf16.msra.mxu0 %v482
  %504 = vmatmul.bf16.gmra.mxu0 %v485
  %v505 = vpop.f32.mrf.mxu0
  %v506 = vadd.f32 0.0, %v505
  %v507 = vpop.f32.mrf.mxu0
  %v508 = vadd.f32 0.0, %v507
  %509 = vmatmul.bf16.gmra.mxu0 %v488
  %v510 = vpop.f32.mrf.mxu0
  %v511 = vadd.f32 0.0, %v510
  %v512 = vpop.f32.mrf.mxu0
  %v513 = vadd.f32 0.0, %v512
  %514 = vmatmul.bf16.gmra.mxu0 %v491
  %v515 = vpop.f32.mrf.mxu0
  %v516 = vadd.f32 0.0, %v515
  %v517 = vpop.f32.mrf.mxu0
  %v518 = vadd.f32 0.0, %v517
  %519 = vmatmul.bf16.gmra.mxu0 %v494
  %v520 = vpop.f32.mrf.mxu0
  %v521 = vadd.f32 0.0, %v520
  %v522 = vpop.f32.mrf.mxu0
  %v523 = vadd.f32 0.0, %v522
  %524 = vdwg.mxu0
  %533 = vrot.lane.b32.xlu0 %v506, 96
  %v534 = vpop.permute.xlu0 %533
  %535 = vrot.lane.b32.xlu0 %v508, 96
  %v536 = vpop.permute.xlu0 %535
  %537 = vrot.lane.b32.xlu0 %v511, 96
  %v538 = vpop.permute.xlu0 %537
  %539 = vrot.lane.b32.xlu0 %v513, 96
  %v540 = vpop.permute.xlu0 %539
  %541 = vrot.lane.b32.xlu0 %v516, 96
  %v542 = vpop.permute.xlu0 %541
  %543 = vrot.lane.b32.xlu0 %v518, 96
  %v544 = vpop.permute.xlu0 %543
  %545 = vrot.lane.b32.xlu0 %v521, 96
  %v546 = vpop.permute.xlu0 %545
  %547 = vrot.lane.b32.xlu0 %v523, 96
  %v548 = vpop.permute.xlu0 %547
  %557 = vxpose.xlu0.b32.start [1/16] %v534, 128
  %558 = vxpose.xlu0.b32.cont [2/16] %v536, 128
  %559 = vxpose.xlu0.b32.cont [3/16] %v538, 128
  %560 = vxpose.xlu0.b32.cont [4/16] %v540, 128
  %561 = vxpose.xlu0.b32.cont [5/16] %v542, 128
  %562 = vxpose.xlu0.b32.cont [6/16] %v544, 128
  %563 = vxpose.xlu0.b32.cont [7/16] %v546, 128
  %564 = vxpose.xlu0.b32.cont [8/16] %v548, 128
  %565 = vxpose.xlu0.b32.cont [9/16] 0.0, 128
  %566 = vxpose.xlu0.b32.cont [10/16] 0.0, 128
  %567 = vxpose.xlu0.b32.cont [11/16] 0.0, 128
  %568 = vxpose.xlu0.b32.cont [12/16] 0.0, 128
  %569 = vxpose.xlu0.b32.cont [13/16] 0.0, 128
  %570 = vxpose.xlu0.b32.cont [14/16] 0.0, 128
  %571 = vxpose.xlu0.b32.cont [15/16] 0.0, 128
  %572 = vxpose.xlu0.b32.end [16/16] 0.0, 128
  %v573 = vpop.trf.xlu0
  %v574 = vpop.trf.xlu0
  %v575 = vpop.trf.xlu0
  %v576 = vpop.trf.xlu0
  %v577 = vpop.trf.xlu0
  %v578 = vpop.trf.xlu0
  %v579 = vpop.trf.xlu0
  %v580 = vpop.trf.xlu0
  %v581 = vpop.trf.xlu0
  %v582 = vpop.trf.xlu0
  %v583 = vpop.trf.xlu0
  %v584 = vpop.trf.xlu0
  %v585 = vpop.trf.xlu0
  %v586 = vpop.trf.xlu0
  %v587 = vpop.trf.xlu0
  %v588 = vpop.trf.xlu0
  %v589 = vpack.c.bf16 %v508, %v506
  %v590 = vpack.c.bf16 %v513, %v511
  %v591 = vpack.c.bf16 %v518, %v516
  %v592 = vpack.c.bf16 %v523, %v521
  %v593 = vpack.c.bf16 %v574, %v573
  %v594 = vpack.c.bf16 %v576, %v575
  %v596 = vsel %vm139, %v589, 0
  %v599 = vsel %vm139, %v590, 0
  %v602 = vsel %vm139, %v591, 0
  %v605 = vsel %vm139, %v592, 0
  %607 = vmatpush.bf16.msra.mxu0 0
  %608 = vmatpush.bf16.msra.mxu0 0
  %609 = vmatpush.bf16.msra.mxu0 0
  %610 = vmatpush.bf16.msra.mxu0 0
  %611 = vmatpush.bf16.msra.mxu0 0
  %612 = vmatpush.bf16.msra.mxu0 0
  %613 = vmatpush.bf16.msra.mxu0 %v594
  %614 = vmatpush.bf16.msra.mxu0 %v593
  %615 = vmatmul.bf16.gmra.mxu0 %v596
  %v616 = vpop.f32.mrf.mxu0
  %v617 = vadd.f32 0.0, %v616
  %v618 = vpop.f32.mrf.mxu0
  %v619 = vadd.f32 0.0, %v618
  %620 = vmatmul.bf16.gmra.mxu0 %v599
  %v621 = vpop.f32.mrf.mxu0
  %v622 = vadd.f32 0.0, %v621
  %v623 = vpop.f32.mrf.mxu0
  %v624 = vadd.f32 0.0, %v623
  %625 = vmatmul.bf16.gmra.mxu0 %v602
  %v626 = vpop.f32.mrf.mxu0
  %v627 = vadd.f32 0.0, %v626
  %v628 = vpop.f32.mrf.mxu0
  %v629 = vadd.f32 0.0, %v628
  %630 = vmatmul.bf16.gmra.mxu0 %v605
  %v631 = vpop.f32.mrf.mxu0
  %v632 = vadd.f32 0.0, %v631
  %v633 = vpop.f32.mrf.mxu0
  %v634 = vadd.f32 0.0, %v633
  %635 = vdwg.mxu0
  %v636 = vmul.f32 %v617, 0.17677669
  %v637 = vmul.f32 %v619, 0.17677669
  %v638 = vmul.f32 %v622, 0.17677669
  %v639 = vmul.f32 %v624, 0.17677669
  %v640 = vmul.f32 %v627, 0.17677669
  %v641 = vmul.f32 %v629, 0.17677669
  %v642 = vmul.f32 %v632, 0.17677669
  %v643 = vmul.f32 %v634, 0.17677669
  %vm644 = vcmask 523264
  %v645 = vsel %vm644, %v636, -inf
  %646 = vmax.xlane.f32.xlu0 %v645
  %v647 = vpop.xlane.xlu0 %646
  %v648 = vsel %vm644, %v637, -inf
  %649 = vmax.xlane.f32.xlu0 %v648
  %v650 = vpop.xlane.xlu0 %649
  %v651 = vsel %vm644, %v638, -inf
  %652 = vmax.xlane.f32.xlu0 %v651
  %v653 = vpop.xlane.xlu0 %652
  %v654 = vsel %vm644, %v639, -inf
  %655 = vmax.xlane.f32.xlu0 %v654
  %v656 = vpop.xlane.xlu0 %655
  %v657 = vsel %vm644, %v640, -inf
  %658 = vmax.xlane.f32.xlu0 %v657
  %v659 = vpop.xlane.xlu0 %658
  %v660 = vsel %vm644, %v641, -inf
  %661 = vmax.xlane.f32.xlu0 %v660
  %v662 = vpop.xlane.xlu0 %661
  %v663 = vsel %vm644, %v642, -inf
  %664 = vmax.xlane.f32.xlu0 %v663
  %v665 = vpop.xlane.xlu0 %664
  %v666 = vsel %vm644, %v643, -inf
  %667 = vmax.xlane.f32.xlu0 %v666
  %v668 = vpop.xlane.xlu0 %667
  %v669 = vsub.f32 %v636, %v647
  %v670 = vsub.f32 %v637, %v650
  %v671 = vsub.f32 %v638, %v653
  %v672 = vsub.f32 %v639, %v656
  %v673 = vsub.f32 %v640, %v659
  %v674 = vsub.f32 %v641, %v662
  %v675 = vsub.f32 %v642, %v665
  %v676 = vsub.f32 %v643, %v668
  %v677 = vmul.f32 %v669, 1.442695
  %v678 = vpow.pop %v677
  %v679 = vmul.f32 %v670, 1.442695
  %v680 = vpow.pop %v679
  %v681 = vmul.f32 %v671, 1.442695
  %v682 = vpow.pop %v681
  %v683 = vmul.f32 %v672, 1.442695
  %v684 = vpow.pop %v683
  %v685 = vmul.f32 %v673, 1.442695
  %v686 = vpow.pop %v685
  %v687 = vmul.f32 %v674, 1.442695
  %v688 = vpow.pop %v687
  %v689 = vmul.f32 %v675, 1.442695
  %v690 = vpow.pop %v689
  %v691 = vmul.f32 %v676, 1.442695
  %v692 = vpow.pop %v691
  %v693 = vsel %vm644, %v678, 0.0
  %694 = vadd.xlane.f32.xlu0 %v693
  %v695 = vpop.xlane.xlu0 %694
  %v696 = vsel %vm644, %v680, 0.0
  %697 = vadd.xlane.f32.xlu0 %v696
  %v698 = vpop.xlane.xlu0 %697
  %v699 = vsel %vm644, %v682, 0.0
  %700 = vadd.xlane.f32.xlu0 %v699
  %v701 = vpop.xlane.xlu0 %700
  %v702 = vsel %vm644, %v684, 0.0
  %703 = vadd.xlane.f32.xlu0 %v702
  %v704 = vpop.xlane.xlu0 %703
  %v705 = vsel %vm644, %v686, 0.0
  %706 = vadd.xlane.f32.xlu0 %v705
  %v707 = vpop.xlane.xlu0 %706
  %v708 = vsel %vm644, %v688, 0.0
  %709 = vadd.xlane.f32.xlu0 %v708
  %v710 = vpop.xlane.xlu0 %709
  %v711 = vsel %vm644, %v690, 0.0
  %712 = vadd.xlane.f32.xlu0 %v711
  %v713 = vpop.xlane.xlu0 %712
  %v714 = vsel %vm644, %v692, 0.0
  %715 = vadd.xlane.f32.xlu0 %v714
  %v716 = vpop.xlane.xlu0 %715
  %v717 = vrcp.pop %v695
  %v718 = vrcp.pop %v698
  %v719 = vrcp.pop %v701
  %v720 = vrcp.pop %v704
  %v721 = vrcp.pop %v707
  %v722 = vrcp.pop %v710
  %v723 = vrcp.pop %v713
  %v724 = vrcp.pop %v716
  %v725 = vmul.f32 %v678, %v717
  %v726 = vmul.f32 %v680, %v718
  %v727 = vmul.f32 %v682, %v719
  %v728 = vmul.f32 %v684, %v720
  %v729 = vmul.f32 %v686, %v721
  %v730 = vmul.f32 %v688, %v722
  %v731 = vmul.f32 %v690, %v723
  %v732 = vmul.f32 %v692, %v724
  %v733 = vpack.c.bf16 %v726, %v725
  %v734 = vpack.c.bf16 %v728, %v727
  %v735 = vpack.c.bf16 %v730, %v729
  %v736 = vpack.c.bf16 %v732, %v731
  %741 = vrot.lane.b32.xlu0 %v589, 64
  %v742 = vpop.permute.xlu0 %741
  %743 = vrot.lane.b32.xlu0 %v590, 64
  %v744 = vpop.permute.xlu0 %743
  %745 = vrot.lane.b32.xlu0 %v591, 64
  %v746 = vpop.permute.xlu0 %745
  %747 = vrot.lane.b32.xlu0 %v592, 64
  %v748 = vpop.permute.xlu0 %747
  %v754 = vsel %vm644, %v733, 0
  %v757 = vsel %vm644, %v734, 0
  %v760 = vsel %vm644, %v735, 0
  %v763 = vsel %vm644, %v736, 0
  %765 = vmatpush.bf16.msra.mxu0 0
  %766 = vmatpush.bf16.msra.mxu0 0
  %767 = vmatpush.bf16.msra.mxu0 0
  %768 = vmatpush.bf16.msra.mxu0 0
  %769 = vmatpush.bf16.msra.mxu0 %v748
  %770 = vmatpush.bf16.msra.mxu0 %v746
  %771 = vmatpush.bf16.msra.mxu0 %v744
  %772 = vmatpush.bf16.msra.mxu0 %v742
  %773 = vmatmul.bf16.gmra.mxu0 %v754
  %v774 = vpop.f32.mrf.mxu0
  %v775 = vadd.f32 0.0, %v774
  %v776 = vpop.f32.mrf.mxu0
  %v777 = vadd.f32 0.0, %v776
  %778 = vmatmul.bf16.gmra.mxu0 %v757
  %v779 = vpop.f32.mrf.mxu0
  %v780 = vadd.f32 0.0, %v779
  %v781 = vpop.f32.mrf.mxu0
  %v782 = vadd.f32 0.0, %v781
  %783 = vmatmul.bf16.gmra.mxu0 %v760
  %v784 = vpop.f32.mrf.mxu0
  %v785 = vadd.f32 0.0, %v784
  %v786 = vpop.f32.mrf.mxu0
  %v787 = vadd.f32 0.0, %v786
  %788 = vmatmul.bf16.gmra.mxu0 %v763
  %v789 = vpop.f32.mrf.mxu0
  %v790 = vadd.f32 0.0, %v789
  %v791 = vpop.f32.mrf.mxu0
  %v792 = vadd.f32 0.0, %v791
  %793 = vdwg.mxu0
  %v794 = vld [vmem:[%s8] sm:$0xff]
  %v795 = vld [vmem:[%s8 + $0x8] sm:$0xff]
  %v796 = vld [vmem:[%s8 + $0x10] sm:$0xff]
  %v797 = vld [vmem:[%s8 + $0x18] sm:$0xff]
  %v798 = vpack.c.bf16 %v777, %v775
  %v799 = vpack.c.bf16 %v782, %v780
  %v800 = vpack.c.bf16 %v787, %v785
  %v801 = vpack.c.bf16 %v792, %v790
  %v802 = vpack.c.bf16 %v795, %v794
  %v803 = vpack.c.bf16 %v797, %v796
  %v805 = vsel %vm139, %v798, 0
  %v808 = vsel %vm139, %v799, 0
  %v811 = vsel %vm139, %v800, 0
  %v814 = vsel %vm139, %v801, 0
  %816 = vmatpush.bf16.msra.mxu0 0
  %817 = vmatpush.bf16.msra.mxu0 0
  %818 = vmatpush.bf16.msra.mxu0 0
  %819 = vmatpush.bf16.msra.mxu0 0
  %820 = vmatpush.bf16.msra.mxu0 0
  %821 = vmatpush.bf16.msra.mxu0 0
  %822 = vmatpush.bf16.msra.mxu0 %v803
  %823 = vmatpush.bf16.msra.mxu0 %v802
  %824 = vmatmul.bf16.gmra.mxu0 %v805
  %v825 = vpop.f32.mrf.mxu0
  %v826 = vadd.f32 0.0, %v825
  %v827 = vpop.f32.mrf.mxu0
  %v828 = vadd.f32 0.0, %v827
  %829 = vmatmul.bf16.gmra.mxu0 %v808
  %v830 = vpop.f32.mrf.mxu0
  %v831 = vadd.f32 0.0, %v830
  %v832 = vpop.f32.mrf.mxu0
  %v833 = vadd.f32 0.0, %v832
  %834 = vmatmul.bf16.gmra.mxu0 %v811
  %v835 = vpop.f32.mrf.mxu0
  %v836 = vadd.f32 0.0, %v835
  %v837 = vpop.f32.mrf.mxu0
  %v838 = vadd.f32 0.0, %v837
  %839 = vmatmul.bf16.gmra.mxu0 %v814
  %v840 = vpop.f32.mrf.mxu0
  %v841 = vadd.f32 0.0, %v840
  %v842 = vpop.f32.mrf.mxu0
  %v843 = vadd.f32 0.0, %v842
  %844 = vdwg.mxu0
  %v845 = vadd.f32 %v466, %v826
  %v846 = vadd.f32 %v467, %v828
  %v847 = vadd.f32 %v468, %v831
  %v848 = vadd.f32 %v469, %v833
  %v849 = vadd.f32 %v470, %v836
  %v850 = vadd.f32 %v471, %v838
  %v851 = vadd.f32 %v472, %v841
  %v852 = vadd.f32 %v473, %v843
  %v853 = vld [vmem:[%s9] sm:$0xff]
  %v854 = vld [vmem:[%s9 + $0x8] sm:$0xff]
  %v855 = vld [vmem:[%s9 + $0x10] sm:$0xff]
  %v856 = vld [vmem:[%s9 + $0x18] sm:$0xff]
  %v857 = vpack.c.bf16 %v846, %v845
  %v858 = vpack.c.bf16 %v848, %v847
  %v859 = vpack.c.bf16 %v850, %v849
  %v860 = vpack.c.bf16 %v852, %v851
  %v861 = vpack.c.bf16 %v854, %v853
  %v862 = vpack.c.bf16 %v856, %v855
  %v863 = vld [vmem:[%s10] sm:$0x1]
  %v865 = vperm.slane %v863, 0
  %v868 = vsel %vm139, %v857, 0
  %v871 = vsel %vm139, %v858, 0
  %v874 = vsel %vm139, %v859, 0
  %v877 = vsel %vm139, %v860, 0
  %879 = vmatpush.bf16.msra.mxu0 0
  %880 = vmatpush.bf16.msra.mxu0 0
  %881 = vmatpush.bf16.msra.mxu0 0
  %882 = vmatpush.bf16.msra.mxu0 0
  %883 = vmatpush.bf16.msra.mxu0 0
  %884 = vmatpush.bf16.msra.mxu0 0
  %885 = vmatpush.bf16.msra.mxu0 %v862
  %886 = vmatpush.bf16.msra.mxu0 %v861
  %887 = vmatmul.bf16.gmra.mxu0 %v868
  %v888 = vpop.f32.mrf.mxu0
  %v889 = vadd.f32 %v865, %v888
  %v890 = vpop.f32.mrf.mxu0
  %v891 = vadd.f32 %v865, %v890
  %892 = vmatmul.bf16.gmra.mxu0 %v871
  %v893 = vpop.f32.mrf.mxu0
  %v894 = vadd.f32 %v865, %v893
  %v895 = vpop.f32.mrf.mxu0
  %v896 = vadd.f32 %v865, %v895
  %897 = vmatmul.bf16.gmra.mxu0 %v874
  %v898 = vpop.f32.mrf.mxu0
  %v899 = vadd.f32 %v865, %v898
  %v900 = vpop.f32.mrf.mxu0
  %v901 = vadd.f32 %v865, %v900
  %902 = vmatmul.bf16.gmra.mxu0 %v877
  %v903 = vpop.f32.mrf.mxu0
  %v904 = vadd.f32 %v865, %v903
  %v905 = vpop.f32.mrf.mxu0
  %v906 = vadd.f32 %v865, %v905
  %907 = vdwg.mxu0
  %v908 = vmax.f32 %v889, 0.0
  %v909 = vmax.f32 %v891, 0.0
  %v910 = vmax.f32 %v894, 0.0
  %v911 = vmax.f32 %v896, 0.0
  %v912 = vmax.f32 %v899, 0.0
  %v913 = vmax.f32 %v901, 0.0
  %v914 = vmax.f32 %v904, 0.0
  %v915 = vmax.f32 %v906, 0.0
  %v916 = vld [vmem:[%s11] sm:$0xff]
  %v917 = vld [vmem:[%s11 + $0x8] sm:$0xff]
  %v918 = vld [vmem:[%s11 + $0x10] sm:$0xff]
  %v919 = vld [vmem:[%s11 + $0x18] sm:$0xff]
  %v920 = vld [vmem:[%s11 + $0x20] sm:$0xff]
  %v921 = vld [vmem:[%s11 + $0x28] sm:$0xff]
  %v922 = vld [vmem:[%s11 + $0x30] sm:$0xff]
  %v923 = vld [vmem:[%s11 + $0x38] sm:$0xff]
  %v924 = vpack.c.bf16 %v909, %v908
  %v925 = vpack.c.bf16 %v911, %v910
  %v926 = vpack.c.bf16 %v913, %v912
  %v927 = vpack.c.bf16 %v915, %v914
  %v928 = vpack.c.bf16 %v917, %v916
  %v929 = vpack.c.bf16 %v919, %v918
  %v930 = vpack.c.bf16 %v921, %v920
  %v931 = vpack.c.bf16 %v923, %v922
  %v932 = vld [vmem:[%s12] sm:$0x1]
  %v934 = vperm.slane %v932, 0
  %v937 = vsel %vm644, %v924, 0
  %v940 = vsel %vm644, %v925, 0
  %v943 = vsel %vm644, %v926, 0
  %v946 = vsel %vm644, %v927, 0
  %948 = vmatpush.bf16.msra.mxu0 0
  %949 = vmatpush.bf16.msra.mxu0 0
  %950 = vmatpush.bf16.msra.mxu0 0
  %951 = vmatpush.bf16.msra.mxu0 0
  %952 = vmatpush.bf16.msra.mxu0 %v931
  %953 = vmatpush.bf16.msra.mxu0 %v930
  %954 = vmatpush.bf16.msra.mxu0 %v929
  %955 = vmatpush.bf16.msra.mxu0 %v928
  %956 = vmatmul.bf16.gmra.mxu0 %v937
  %v957 = vpop.f32.mrf.mxu0
  %v958 = vadd.f32 %v934, %v957
  %v959 = vpop.f32.mrf.mxu0
  %v960 = vadd.f32 %v934, %v959
  %961 = vmatmul.bf16.gmra.mxu0 %v940
  %v962 = vpop.f32.mrf.mxu0
  %v963 = vadd.f32 %v934, %v962
  %v964 = vpop.f32.mrf.mxu0
  %v965 = vadd.f32 %v934, %v964
  %966 = vmatmul.bf16.gmra.mxu0 %v943
  %v967 = vpop.f32.mrf.mxu0
  %v968 = vadd.f32 %v934, %v967
  %v969 = vpop.f32.mrf.mxu0
  %v970 = vadd.f32 %v934, %v969
  %971 = vmatmul.bf16.gmra.mxu0 %v946
  %v972 = vpop.f32.mrf.mxu0
  %v973 = vadd.f32 %v934, %v972
  %v974 = vpop.f32.mrf.mxu0
  %v975 = vadd.f32 %v934, %v974
  %976 = vdwg.mxu0
  %v977 = vadd.f32 %v958, %v845
  %v978 = vadd.f32 %v960, %v846
  %v979 = vadd.f32 %v963, %v847
  %v980 = vadd.f32 %v965, %v848
  %v981 = vadd.f32 %v968, %v849
  %v982 = vadd.f32 %v970, %v850
  %v983 = vadd.f32 %v973, %v851
  %v984 = vadd.f32 %v975, %v852
  %985 = vst.msk [vmem:[%s13] sm:$0xff] %vm139, %v977
  %986 = vst.msk [vmem:[%s13 + $0x8] sm:$0xff] %vm139, %v978
  %987 = vst.msk [vmem:[%s13 + $0x10] sm:$0xff] %vm139, %v979
  %988 = vst.msk [vmem:[%s13 + $0x18] sm:$0xff] %vm139, %v980
  %989 = vst.msk [vmem:[%s13 + $0x20] sm:$0xff] %vm139, %v981
  %990 = vst.msk [vmem:[%s13 + $0x28] sm:$0xff] %vm139, %v982
  %991 = vst.msk [vmem:[%s13 + $0x30] sm:$0xff] %vm139, %v983
  %992 = vst.msk [vmem:[%s13 + $0x38] sm:$0xff] %vm139, %v984
  // Predicated region
  $region54: #{monodtr_test_forward.5} parent=0 // pred_check
    _
  $region55: #{monodtr_test_forward.5} parent=0 // pred_check_branch
    %994 = sbr.rel (0) target = $region57
  $region56: #{monodtr_test_forward.5} parent=0 // pred_region
    _
  $region57: #{monodtr_test_forward.5} parent=0 // pred_fallthru
    _
  // Predicated region
  $region58: #{monodtr_test_forward.5} parent=0 // pred_check
    _
  $region59: #{monodtr_test_forward.5} parent=0 // pred_check_branch
    %996 = sbr.rel (0) target = $region61
  $region60: #{monodtr_test_forward.5} parent=0 // pred_region
    _
  $region61: #{monodtr_test_forward.5} parent=0 // pred_fallthru
    _

// kernel: monodtr_test_forward.7
$region0: #{monodtr_test_forward.7}
  #allocation0 [shape = 'u32[]', space=smem, size = 0x4, offset = 0x4, fixed_abs, tag = 'smem constant byte address 0x4 - core index']
  #allocation1 [shape = 'u32[72,128]{1,0:T(1,128)}', space=vmem, size = 0x9000, scoped, tag = 'internal scratch']
  %s0 = inlined_call_operand.vmem [shape: f32[3,128], index: 0, kind: input, shape index: {}]
  %s1 = inlined_call_operand.vmem [shape: f32[4,128], index: 1, kind: input, shape index: {}]
  %s2 = inlined_call_operand.vmem [shape: f32[4,128], index: 2, kind: input, shape index: {}]
  %s3 = inlined_call_operand.vmem [shape: f32[1,128], index: 3, kind: output, shape index: {0}]
  %s4 = inlined_call_operand.vmem [shape: f32[4,128], index: 4, kind: output, shape index: {1}]
  %s5 = inlined_call_operand.vmem [shape: s32[1,128], index: 5, kind: output, shape index: {2}]
  %6 = xla_tuple %s3, %s4, %s5
  %s7 = sld [smem:[#allocation0]]
  $region38: #{monodtr_test_forward.7} parent=0
    _
  %s9 = ssub.s32 1, %s7
  %s10 = scalar_select 0, %s9, %s7
  // Predicated region
  $region2: #{monodtr_test_forward.7} parent=0 // pred_check
    _
  $region3: #{monodtr_test_forward.7} parent=0 // pred_check_branch
    %12 = sbr.rel (0) target = $region5
  $region4: #{monodtr_test_forward.7} parent=0 // pred_region
    _
  $region5: #{monodtr_test_forward.7} parent=0 // pred_fallthru
    _
  // Predicated region
  $region6: #{monodtr_test_forward.7} parent=0 // pred_check
    _
  $region7: #{monodtr_test_forward.7} parent=0 // pred_check_branch
    %14 = sbr.rel (0) target = $region9
  $region8: #{monodtr_test_forward.7} parent=0 // pred_region
    _
  $region9: #{monodtr_test_forward.7} parent=0 // pred_fallthru
    _
  // Predicated region
  $region10: #{monodtr_test_forward.7} parent=0 // pred_check
    _
  $region11: #{monodtr_test_forward.7} parent=0 // pred_check_branch
    %16 = sbr.rel (0) target = $region13
  $region12: #{monodtr_test_forward.7} parent=0 // pred_region
    _
  $region13: #{monodtr_test_forward.7} parent=0 // pred_fallthru
    _
  %v17 = vld [vmem:[%s0] sm:$0x7]
  %v18 = vsub.f32 0.0, %v17
  %v19 = vmul.f32 %v18, 1.442695
  %v20 = vpow.pop %v19
  %v21 = vadd.f32 %v20, 1.0
  %v22 = vrcp.pop %v21
  %vm23 = vcmask 1042432
  %v24 = vsel %vm23, %v22, -inf
  %v25 = vrot.slane %v24, 4
  %v26 = vmax.f32 %v24, %v25
  %v27 = vrot.slane %v26, 2
  %v28 = vmax.f32 %v26, %v27
  %v29 = vrot.slane %v28, 1
  %v30 = vmax.f32 %v28, %v29
  %31 = vst [vmem:[%s3] sm:$0x1] %v30
  %v32 = vlaneseq
  %v33 = vshrl.u32 %v32, 7
  %vm34 = vcmp.ge.f32.partialorder %v22, %v30
  %v35 = vsel %vm34, %v33, 3
  %v36 = vsel %vm23, %v35, 2147483647
  %v37 = vrot.slane %v36, 4
  %vm38 = vcmp.lt.s32.totalorder %v36, %v37
  %v39 = vsel %vm38, %v36, %v37
  %v40 = vrot.slane %v39, 2
  %vm41 = vcmp.lt.s32.totalorder %v39, %v40
  %v42 = vsel %vm41, %v39, %v40
  %v43 = vrot.slane %v42, 1
  %vm44 = vcmp.lt.s32.totalorder %v42, %v43
  %v45 = vsel %vm44, %v42, %v43
  %46 = vst [vmem:[%s5] sm:$0x1] %v45
  %v47 = vld [vmem:[%s2] sm:$0xf]
  %v48 = vld [vmem:[%s1] sm:$0xf]
  %v49 = vmin.f32 %v48, 4.1351666
  %v51 = vrot.slane %v47, 2
  %v53 = vmul.f32 %v48, %v51
  %v54 = vadd.f32 %v47, %v53
  %v55 = vmul.f32 %v49, 1.442695
  %v56 = vpow.pop %v55
  %v57 = vmul.f32 %v47, %v56
  %v58 = vmul.f32 %v57, 0.5
  %v60 = vrot.slane %v58, 2
  %v62 = vsub.f32 %v54, %v60
  %v63 = vadd.f32 %v54, %v60
  %v65 = vrot.slane %v63, 6
  %vm67 = vcmask 1041408
  %v68 = vsel %vm67, %v62, %v65
  %v69 = vsel %vm23, %v68, %v65
  %70 = vst [vmem:[%s4] sm:$0xf] %v69
  // Predicated region
  $region14: #{monodtr_test_forward.7} parent=0 // pred_check
    _
  $region15: #{monodtr_test_forward.7} parent=0 // pred_check_branch
    %72 = sbr.rel (0) target = $region17
  $region16: #{monodtr_test_forward.7} parent=0 // pred_region
    _
  $region17: #{monodtr_test_forward.7} parent=0 // pred_fallthru
    _
  // Predicated region
  $region18: #{monodtr_test_forward.7} parent=0 // pred_check
    _
  $region19: #{monodtr_test_forward.7} parent=0 // pred_check_branch
    %74 = sbr.rel (0) target = $region21
  $region20: #{monodtr_test_forward.7} parent=0 // pred_region
    _
  $region21: #{monodtr_test_forward.7} parent=0 // pred_fallthru
    _
  // Predicated region
  $region22: #{monodtr_test_forward.7} parent=0 // pred_check
    _
  $region23: #{monodtr_test_forward.7} parent=0 // pred_check_branch
    %76 = sbr.rel (0) target = $region25
  $region24: #{monodtr_test_forward.7} parent=0 // pred_region
    _
  $region25: #{monodtr_test_forward.7} parent=0 // pred_fallthru
    _
  // Predicated region
  $region26: #{monodtr_test_forward.7} parent=0 // pred_check
    _
  $region27: #{monodtr_test_forward.7} parent=0 // pred_check_branch
    %78 = sbr.rel (0) target = $region29
  $region28: #{monodtr_test_forward.7} parent=0 // pred_region
    _
  $region29: #{monodtr_test_forward.7} parent=0 // pred_fallthru
    _
  // Predicated region
  $region30: #{monodtr_test_forward.7} parent=0 // pred_check
    _
  $region31: #{monodtr_test_forward.7} parent=0 // pred_check_branch
    %80 = sbr.rel (0) target = $region33
  $region32: #{monodtr_test_forward.7} parent=0 // pred_region
    _
  $region33: #{monodtr_test_forward.7} parent=0 // pred_fallthru
    _
  // Predicated region
  $region34: #{monodtr_test_forward.7} parent=0 // pred_check
    _
  $region35: #{monodtr_test_forward.7} parent=0 // pred_check_branch
    %82 = sbr.rel (0) target = $region37
  $region36: #{monodtr_test_forward.7} parent=0 // pred_region
    _
  $region37: #{monodtr_test_forward.7} parent=0 // pred_fallthru
    _

</llo_original>
